<compile_context>
chip_gen: v7x
topology: tpu7x:2x2x1
jax: 0.10.0
libtpu: 0.0.40
codegen_flags: <defaults>
</compile_context>

<pallas_src>
import functools
import jax
import jax.numpy as jnp
from jax.experimental import pallas as pl
from jax.experimental.pallas import tpu as pltpu

EPS = 1e-5          # PyTorch BatchNorm default eps
LEAKY_SLOPE = 0.01  # PyTorch LeakyReLU default negative_slope


# ---------------------------- Pallas kernel ----------------------------

def _fused_forward_kernel(x_ref, w_ref, v_ref, o_ref,
                          pool1_ref, padA_ref, padB_ref, pool2_ref,
                          *, KH, K1D, W, C1, Cm, Co, CTX, OFFS):
    TB, H, _ = x_ref.shape
    L1 = H - KH + 1          # Conv2d output length (kernel spans full width)
    L2 = L1 // 2             # after first MaxPool1d(2,2)
    L3 = L2 // 2             # after block MaxPool1d(2,2) == last_chunk_len
    OFF_W1, OFF_WA, OFF_WB, OFF_ATT = OFFS

    ws = w_ref[...]          # (Rw, 16) packed matmul weights
    vs = v_ref[...]          # (16, 16) packed scale/shift/bias rows
    x = x_ref[...]           # (TB, H, W)

    # ---- first_conv_1: BN2d(1) folded into weights, Conv2d((KH, W)) as a
    #      single im2col matmul, BN2d(C1)+bias folded, LeakyReLU. ----
    xcol = jnp.concatenate([x[:, kh:kh + L1, :] for kh in range(KH)], axis=-1)
    xcol = xcol.reshape(TB * L1, KH * W)                         # (TB*L1, KH*W)
    w1 = ws[OFF_W1:OFF_W1 + KH * W, 0:C1]
    y = jnp.dot(xcol, w1, preferred_element_type=jnp.float32)    # (TB*L1, C1)
    y = y * vs[0:1, 0:C1] + vs[1:2, 0:C1]
    y = jnp.where(y >= 0.0, y, LEAKY_SLOPE * y)

    # ---- first_pools[0]: MaxPool1d(k=2, s=2) over L (strided VMEM reads) ----
    pool1_ref[...] = y
    p1 = jnp.maximum(pool1_ref[pl.ds(0, TB * L2, stride=2), :],
                     pool1_ref[pl.ds(1, TB * L2, stride=2), :])  # (TB*L2, C1)

    # ---- CnnBasicBlock.block1: Conv1d(C1->Cm, k=K1D, pad=1) + BN + ReLU ----
    padA_ref[:, 0:1, :] = jnp.zeros((TB, 1, C1), jnp.float32)
    padA_ref[:, L2 + 1:L2 + 2, :] = jnp.zeros((TB, 1, C1), jnp.float32)
    padA_ref[:, 1:L2 + 1, :] = p1.reshape(TB, L2, C1)
    acol = jnp.concatenate([padA_ref[:, k:k + L2, :] for k in range(K1D)],
                           axis=-1).reshape(TB * L2, K1D * C1)
    wa = ws[OFF_WA:OFF_WA + K1D * C1, 0:Cm]
    ya = jnp.dot(acol, wa, preferred_element_type=jnp.float32)   # (TB*L2, Cm)
    ya = ya * vs[2:3, 0:Cm] + vs[3:4, 0:Cm]
    ya = jnp.maximum(ya, 0.0)
    # TODO(synk): dropout_rate=0, n_dropouts=1 -> F.dropout is the identity;
    # stochastic dropout / multiple_dropouts RNG is not reproduced.

    # ---- CnnBasicBlock.block_2: Conv1d(Cm->Co, k=K1D, pad=1) + BN + ReLU ----
    padB_ref[:, 0:1, :] = jnp.zeros((TB, 1, Cm), jnp.float32)
    padB_ref[:, L2 + 1:L2 + 2, :] = jnp.zeros((TB, 1, Cm), jnp.float32)
    padB_ref[:, 1:L2 + 1, :] = ya.reshape(TB, L2, Cm)
    bcol = jnp.concatenate([padB_ref[:, k:k + L2, :] for k in range(K1D)],
                           axis=-1).reshape(TB * L2, K1D * Cm)
    wb = ws[OFF_WB:OFF_WB + K1D * Cm, 0:Co]
    yb = jnp.dot(bcol, wb, preferred_element_type=jnp.float32)   # (TB*L2, Co)
    yb = yb * vs[4:5, 0:Co] + vs[5:6, 0:Co]
    yb = jnp.maximum(yb, 0.0)                  # extra F.relu is idempotent

    # ---- block pool: MaxPool1d(k=2, s=2) -> (TB*L3, Co), channels-last ----
    pool2_ref[...] = yb
    xa = jnp.maximum(pool2_ref[pl.ds(0, TB * L3, stride=2), :],
                     pool2_ref[pl.ds(1, TB * L3, stride=2), :])  # (TB*L3, Co)

    # ---- ContextAttention + output Linear(F, 1); last dropout p=0 -> identity
    attw = ws[OFF_ATT:OFF_ATT + Co, 0:CTX]
    h = jnp.tanh(jnp.dot(xa, attw, preferred_element_type=jnp.float32)
                 + vs[6:7, 0:CTX])                               # (TB*L3, CTX)
    s = jnp.sum(h * vs[7:8, 0:CTX], axis=-1, keepdims=True)      # (TB*L3, 1)
    s = s.reshape(TB, L3, 1)
    m = jnp.max(s, axis=1, keepdims=True)
    e = jnp.exp(s - m)
    a = e / jnp.sum(e, axis=1, keepdims=True)      # exact divide (softmax)
    wsum = jnp.sum(xa.reshape(TB, L3, Co) * a, axis=1)            # (TB, Co)
    out = jnp.sum(wsum * vs[8:9, 0:Co], axis=-1, keepdims=True) + vs[9:10, 0:1]
    o_ref[...] = out.astype(o_ref.dtype)                          # (TB, 1)


# ------------------------------ wrapper ------------------------------

def _bn_fold(gamma, beta, mean, var):
    scale = gamma / jnp.sqrt(var + EPS)
    shift = beta - mean * scale
    return scale, shift


def _round8(n):
    return ((n + 7) // 8) * 8


def forward(x, p, *, tb=8):
    B, H, W = x.shape
    C1, _, KH, KW = p["conv1_w"].shape
    assert KW == W, "Conv2d kernel width must span the full input width"
    Cm, _, K1D = p["conva_w"].shape
    Co = p["convb_w"].shape[0]
    CTX = p["att_w"].shape[1]
    L1 = H - KH + 1
    assert L1 % 2 == 0 and (L1 // 2) % 2 == 0
    L2, L3 = L1 // 2, L1 // 4
    TB = min(tb, B)
    assert B % TB == 0, "batch must be divisible by the per-step tile TB"

    # ---- trace-time folding (tiny, weights only) ----
    s0, sh0 = _bn_fold(p["bn0_g"], p["bn0_b"], p["bn0_m"], p["bn0_v"])   # BN2d(1)
    s1, sh1 = _bn_fold(p["bn1_g"], p["bn1_b"], p["bn1_m"], p["bn1_v"])
    w1_flat = p["conv1_w"].reshape(C1, KH * KW)           # rows c, cols kh*W+kw
    w1m = (w1_flat * s0[0]).T                             # (KH*W, C1), BN0 folded
    b1_eff = p["conv1_b"] + sh0[0] * jnp.sum(w1_flat, axis=1)
    sc1, shf1 = s1, sh1 + s1 * b1_eff

    sa, sha = _bn_fold(p["bna_g"], p["bna_b"], p["bna_m"], p["bna_v"])
    wam = p["conva_w"].transpose(2, 1, 0).reshape(K1D * C1, Cm)   # rows k*C1+ci
    sca, shfa = sa, sha + sa * p["conva_b"]

    sb, shb = _bn_fold(p["bnb_g"], p["bnb_b"], p["bnb_m"], p["bnb_v"])
    wbm = p["convb_w"].transpose(2, 1, 0).reshape(K1D * Cm, Co)
    scb, shfb = sb, shb + sb * p["convb_b"]

    # ---- pack matmul weights into one slab (row offsets 8-aligned) ----
    WCOL = max(C1, Cm, Co, CTX)
    r1, ra, rb, rt = _round8(KH * W), _round8(K1D * C1), _round8(K1D * Cm), _round8(Co)
    OFFS = (0, r1, r1 + ra, r1 + ra + rb)

    def _pad_block(a, rows, cols):
        return jnp.zeros((rows, cols), jnp.float32).at[:a.shape[0], :a.shape[1]].set(a)

    wslab = jnp.concatenate([
        _pad_block(w1m, r1, WCOL), _pad_block(wam, ra, WCOL),
        _pad_block(wbm, rb, WCOL), _pad_block(p["att_w"], rt, WCOL),
    ], axis=0)                                             # (112, 16) here

    # ---- pack all per-channel scale/shift/bias vectors into one (16,16) slab
    def _row(v):
        return jnp.zeros((WCOL,), jnp.float32).at[:v.shape[0]].set(v)

    vslab = jnp.stack([
        _row(sc1), _row(shf1), _row(sca), _row(shfa), _row(scb), _row(shfb),
        _row(p["att_b"]), _row(p["att_cv"][:, 0]),
        _row(p["out_w"][:, 0]), _row(p["out_b"]),
    ], axis=0)
    vslab = jnp.concatenate(
        [vslab, jnp.zeros((16 - vslab.shape[0], WCOL), jnp.float32)], axis=0)

    # ---- advisory cost estimate (per call) ----
    flops_per_elem = (2 * L1 * C1 * KH * W + 2 * L2 * Cm * K1D * C1
                      + 2 * L2 * Co * K1D * Cm + 2 * L3 * Co * CTX
                      + 4 * L3 * CTX + 4 * L3 * Co + 4 * Co)
    bytes_accessed = 4 * (B * H * W + int(wslab.size) + int(vslab.size) + B)

    kernel = functools.partial(
        _fused_forward_kernel, KH=KH, K1D=K1D, W=W,
        C1=C1, Cm=Cm, Co=Co, CTX=CTX, OFFS=OFFS)

    out = pl.pallas_call(
        kernel,
        out_shape=jax.ShapeDtypeStruct((B, 1), jnp.float32),
        grid=(B // TB,),
        in_specs=[
            pl.BlockSpec((TB, H, W), lambda g: (g, 0, 0)),
            pl.BlockSpec(wslab.shape, lambda g: (0, 0)),
            pl.BlockSpec(vslab.shape, lambda g: (0, 0)),
        ],
        out_specs=pl.BlockSpec((TB, 1), lambda g: (g, 0)),
        scratch_shapes=[
            pltpu.VMEM((TB * L1, C1), jnp.float32),       # pool-1 staging
            pltpu.VMEM((TB, L2 + 2, C1), jnp.float32),    # conv_a zero-pad
            pltpu.VMEM((TB, L2 + 2, Cm), jnp.float32),    # conv_b zero-pad
            pltpu.VMEM((TB * L2, Co), jnp.float32),       # pool-2 staging
        ],
        compiler_params=pltpu.CompilerParams(
            dimension_semantics=("parallel",),
            vmem_limit_bytes=4 * 1024 * 1024),
        cost_estimate=pl.CostEstimate(
            flops=int(B * flops_per_elem),
            transcendentals=int(B * (L3 * CTX + L3)),
            bytes_accessed=int(bytes_accessed)),
    )(x, wslab, vslab)
    return out


# --------------------------- deterministic init ---------------------------

def init_params(key):
    C1, KH, KW = 8, 3, 8          # first block out_feature / kernel (3, W)
    C_MID, C_OUT, K = 16, 16, 3   # middle CnnBasicBlock
    CTX, F = 4, C_OUT             # context_size, attention input_feature

    ks = jax.random.split(key, 10)

    def u(k, shape, a):
        return jax.random.uniform(k, shape, jnp.float32, -a, a)

    return {
        # BatchNorm2d(1) on the input (eval-mode running stats)
        "bn0_g": jnp.full((1,), 1.2, jnp.float32), "bn0_b": jnp.full((1,), 0.1, jnp.float32),
        "bn0_m": jnp.zeros((1,), jnp.float32), "bn0_v": jnp.ones((1,), jnp.float32),
        # Conv2d(1 -> C1, (KH, KW)) + BatchNorm2d(C1)
        "conv1_w": u(ks[0], (C1, 1, KH, KW), 0.2), "conv1_b": u(ks[1], (C1,), 0.1),
        "bn1_g": jnp.ones((C1,), jnp.float32), "bn1_b": jnp.zeros((C1,), jnp.float32),
        "bn1_m": jnp.zeros((C1,), jnp.float32), "bn1_v": jnp.ones((C1,), jnp.float32),
        # CnnBasicBlock.block1: Conv1d(C1 -> C_MID, k=3, pad=1) + BN
        "conva_w": u(ks[2], (C_MID, C1, K), 0.2), "conva_b": u(ks[3], (C_MID,), 0.1),
        "bna_g": jnp.ones((C_MID,), jnp.float32), "bna_b": jnp.zeros((C_MID,), jnp.float32),
        "bna_m": jnp.zeros((C_MID,), jnp.float32), "bna_v": jnp.ones((C_MID,), jnp.float32),
        # CnnBasicBlock.block_2: Conv1d(C_MID -> C_OUT, k=3, pad=1) + BN
        "convb_w": u(ks[4], (C_OUT, C_MID, K), 0.2), "convb_b": u(ks[5], (C_OUT,), 0.1),
        "bnb_g": jnp.ones((C_OUT,), jnp.float32), "bnb_b": jnp.zeros((C_OUT,), jnp.float32),
        "bnb_m": jnp.zeros((C_OUT,), jnp.float32), "bnb_v": jnp.ones((C_OUT,), jnp.float32),
        # ContextAttention: Linear(F, CTX) xavier-uniform, bias zeroed; chunk ~ U(0,1)
        "att_w": u(ks[6], (F, CTX), (6.0 / (F + CTX)) ** 0.5),
        "att_b": jnp.zeros((CTX,), jnp.float32),
        "att_cv": jax.random.uniform(ks[7], (CTX, 1), jnp.float32, 0.0, 1.0),
        # output Linear(F, 1) (stored transposed as (F, 1))
        "out_w": u(ks[8], (F, 1), 1.0 / (F ** 0.5)),
        "out_b": u(ks[9], (1,), 1.0 / (F ** 0.5)),
    }


if __name__ == "__main__":
    # Input (B, H, W): viewed as (B, 1, H, W); Conv2d kernel (3, W=8), H=34 so
    # H_out=32 -> first pool -> 16 -> block pool -> last_chunk_len = 8.
    # B=16 with TB=8 -> grid of 2 parallel steps (keeps both v7x TCs busy).
    B, H, W = 16, 34, 8
    key = jax.random.PRNGKey(0)
    kx, kp = jax.random.split(key)
    x = jax.random.normal(kx, (B, H, W), jnp.float32)
    params = init_params(kp)

    out = jax.jit(forward)(x, params)
    out = jax.block_until_ready(out)
    assert out.shape == (B, 1) and out.dtype == jnp.float32
    assert bool(jnp.all(jnp.isfinite(out)))
    print("KERNEL_OK")
</pallas_src>

<mosaic_0001>
module attributes {stable_mosaic.version = 11 : i64} {
  func.func @_fused_forward_kernel(%arg0: i32, %arg1: memref<8x34x8xf32, #tpu.memory_space<vmem>>, %arg2: memref<112x16xf32, #tpu.memory_space<vmem>>, %arg3: memref<16x16xf32, #tpu.memory_space<vmem>>, %arg4: memref<8x1xf32, #tpu.memory_space<vmem>>, %arg5: memref<256x8xf32, #tpu.memory_space<vmem>>, %arg6: memref<8x18x8xf32, #tpu.memory_space<vmem>>, %arg7: memref<8x18x16xf32, #tpu.memory_space<vmem>>, %arg8: memref<128x16xf32, #tpu.memory_space<vmem>>) attributes {dimension_semantics = [#tpu.dimension_semantics<parallel>], iteration_bounds = array<i64: 2>, scalar_prefetch = 0 : i64, scratch_operands = 4 : i64, tpu.core_type = #tpu.core_type<tc>, window_params = [{transform_indices = @transform_0, window_bounds = array<i64: 8, 34, 8>}, {pipeline_mode = #tpu.pipeline_mode<synchronous>, transform_indices = @transform_1, window_bounds = array<i64: 112, 16>}, {pipeline_mode = #tpu.pipeline_mode<synchronous>, transform_indices = @transform_2, window_bounds = array<i64: 16, 16>}, {transform_indices = @transform_3, window_bounds = array<i64: 8, 1>}]} {
    %c0 = arith.constant 0 : index
    %c0_0 = arith.constant 0 : index
    %0 = vector.load %arg2[%c0, %c0_0] : memref<112x16xf32, #tpu.memory_space<vmem>>, vector<112x16xf32>
    %c0_1 = arith.constant 0 : index
    %c0_2 = arith.constant 0 : index
    %1 = vector.load %arg3[%c0_1, %c0_2] : memref<16x16xf32, #tpu.memory_space<vmem>>, vector<16x16xf32>
    %c0_3 = arith.constant 0 : index
    %c0_4 = arith.constant 0 : index
    %c0_5 = arith.constant 0 : index
    %2 = vector.load %arg1[%c0_3, %c0_4, %c0_5] : memref<8x34x8xf32, #tpu.memory_space<vmem>>, vector<8x34x8xf32>
    %3 = vector.extract_strided_slice %2 {offsets = [0, 0, 0], sizes = [8, 32, 8], strides = [1, 1, 1]} : vector<8x34x8xf32> to vector<8x32x8xf32>
    %4 = vector.extract_strided_slice %2 {offsets = [0, 1, 0], sizes = [8, 32, 8], strides = [1, 1, 1]} : vector<8x34x8xf32> to vector<8x32x8xf32>
    %5 = vector.extract_strided_slice %2 {offsets = [0, 2, 0], sizes = [8, 32, 8], strides = [1, 1, 1]} : vector<8x34x8xf32> to vector<8x32x8xf32>
    %6 = tpu.concatenate %3, %4, %5 in 2 : vector<8x32x8xf32>, vector<8x32x8xf32>, vector<8x32x8xf32> -> vector<8x32x24xf32>
    %7 = vector.shape_cast %6 : vector<8x32x24xf32> to vector<256x24xf32>
    %8 = vector.extract_strided_slice %0 {offsets = [0, 0], sizes = [24, 8], strides = [1, 1]} : vector<112x16xf32> to vector<24x8xf32>
    %cst = arith.constant dense<0.000000e+00> : vector<256x8xf32>
    %9 = tpu.matmul %7, %8, %cst {dimension_numbers = #tpu.dot_dimension_numbers<[1], [0], [0], [1], [0, 0, 1, 1], [], []>} : vector<256x24xf32>, vector<24x8xf32>, vector<256x8xf32> -> vector<256x8xf32>
    %10 = vector.extract_strided_slice %1 {offsets = [0, 0], sizes = [1, 8], strides = [1, 1]} : vector<16x16xf32> to vector<1x8xf32>
    %11 = vector.broadcast %10 : vector<1x8xf32> to vector<256x8xf32>
    %12 = arith.mulf %9, %11 : vector<256x8xf32>
    %13 = vector.extract_strided_slice %1 {offsets = [1, 0], sizes = [1, 8], strides = [1, 1]} : vector<16x16xf32> to vector<1x8xf32>
    %14 = vector.broadcast %13 : vector<1x8xf32> to vector<256x8xf32>
    %15 = arith.addf %12, %14 : vector<256x8xf32>
    %cst_6 = arith.constant 0.000000e+00 : f32
    %16 = vector.broadcast %cst_6 : f32 to vector<256x8xf32>
    %17 = arith.cmpf oge, %15, %16 : vector<256x8xf32>
    %cst_7 = arith.constant 0.00999999977 : f32
    %18 = vector.broadcast %cst_7 : f32 to vector<256x8xf32>
    %19 = arith.mulf %18, %15 : vector<256x8xf32>
    %20 = arith.select %17, %15, %19 : vector<256x8xi1>, vector<256x8xf32>
    %c0_8 = arith.constant 0 : index
    %c0_9 = arith.constant 0 : index
    %21 = vector.load %arg5[%c0_8, %c0_9] : memref<256x8xf32, #tpu.memory_space<vmem>>, vector<256x8xf32>
    tpu.vector_store %arg5[%c0_8, %c0_9], %20 {strides = array<i32>} : memref<256x8xf32, #tpu.memory_space<vmem>>, vector<256x8xf32>,
    %c0_10 = arith.constant 0 : index
    %c0_11 = arith.constant 0 : index
    %22 = tpu.strided_load %arg5[%c0_10, %c0_11] {strides = array<i32: 2, 1>} : memref<256x8xf32, #tpu.memory_space<vmem>>, vector<128x8xf32>
    %c1 = arith.constant 1 : index
    %c0_12 = arith.constant 0 : index
    %23 = tpu.strided_load %arg5[%c1, %c0_12] {strides = array<i32: 2, 1>} : memref<256x8xf32, #tpu.memory_space<vmem>>, vector<128x8xf32>
    %24 = arith.maximumf %22, %23 : vector<128x8xf32>
    %cst_13 = arith.constant 0.000000e+00 : f32
    %25 = vector.broadcast %cst_13 : f32 to vector<8x1x8xf32>
    %c0_14 = arith.constant 0 : index
    %c0_15 = arith.constant 0 : index
    %c0_16 = arith.constant 0 : index
    %26 = vector.load %arg6[%c0_14, %c0_15, %c0_16] : memref<8x18x8xf32, #tpu.memory_space<vmem>>, vector<8x1x8xf32>
    tpu.vector_store %arg6[%c0_14, %c0_15, %c0_16], %25 {strides = array<i32>} : memref<8x18x8xf32, #tpu.memory_space<vmem>>, vector<8x1x8xf32>,
    %cst_17 = arith.constant 0.000000e+00 : f32
    %27 = vector.broadcast %cst_17 : f32 to vector<8x1x8xf32>
    %c0_18 = arith.constant 0 : index
    %c17 = arith.constant 17 : index
    %c0_19 = arith.constant 0 : index
    %28 = vector.load %arg6[%c0_18, %c17, %c0_19] : memref<8x18x8xf32, #tpu.memory_space<vmem>>, vector<8x1x8xf32>
    tpu.vector_store %arg6[%c0_18, %c17, %c0_19], %27 {strides = array<i32>} : memref<8x18x8xf32, #tpu.memory_space<vmem>>, vector<8x1x8xf32>,
    %29 = vector.shape_cast %24 : vector<128x8xf32> to vector<8x16x8xf32>
    %c0_20 = arith.constant 0 : index
    %c1_21 = arith.constant 1 : index
    %c0_22 = arith.constant 0 : index
    %30 = vector.load %arg6[%c0_20, %c1_21, %c0_22] : memref<8x18x8xf32, #tpu.memory_space<vmem>>, vector<8x16x8xf32>
    tpu.vector_store %arg6[%c0_20, %c1_21, %c0_22], %29 {strides = array<i32>} : memref<8x18x8xf32, #tpu.memory_space<vmem>>, vector<8x16x8xf32>,
    %c0_23 = arith.constant 0 : index
    %c0_24 = arith.constant 0 : index
    %c0_25 = arith.constant 0 : index
    %31 = vector.load %arg6[%c0_23, %c0_24, %c0_25] : memref<8x18x8xf32, #tpu.memory_space<vmem>>, vector<8x16x8xf32>
    %c0_26 = arith.constant 0 : index
    %c1_27 = arith.constant 1 : index
    %c0_28 = arith.constant 0 : index
    %32 = vector.load %arg6[%c0_26, %c1_27, %c0_28] : memref<8x18x8xf32, #tpu.memory_space<vmem>>, vector<8x16x8xf32>
    %c0_29 = arith.constant 0 : index
    %c2 = arith.constant 2 : index
    %c0_30 = arith.constant 0 : index
    %33 = vector.load %arg6[%c0_29, %c2, %c0_30] : memref<8x18x8xf32, #tpu.memory_space<vmem>>, vector<8x16x8xf32>
    %34 = tpu.concatenate %31, %32, %33 in 2 : vector<8x16x8xf32>, vector<8x16x8xf32>, vector<8x16x8xf32> -> vector<8x16x24xf32>
    %35 = vector.shape_cast %34 : vector<8x16x24xf32> to vector<128x24xf32>
    %36 = vector.extract_strided_slice %0 {offsets = [24, 0], sizes = [24, 16], strides = [1, 1]} : vector<112x16xf32> to vector<24x16xf32>
    %cst_31 = arith.constant dense<0.000000e+00> : vector<128x16xf32>
    %37 = tpu.matmul %35, %36, %cst_31 {dimension_numbers = #tpu.dot_dimension_numbers<[1], [0], [0], [1], [0, 0, 1, 1], [], []>} : vector<128x24xf32>, vector<24x16xf32>, vector<128x16xf32> -> vector<128x16xf32>
    %38 = vector.extract_strided_slice %1 {offsets = [2, 0], sizes = [1, 16], strides = [1, 1]} : vector<16x16xf32> to vector<1x16xf32>
    %39 = vector.broadcast %38 : vector<1x16xf32> to vector<128x16xf32>
    %40 = arith.mulf %37, %39 : vector<128x16xf32>
    %41 = vector.extract_strided_slice %1 {offsets = [3, 0], sizes = [1, 16], strides = [1, 1]} : vector<16x16xf32> to vector<1x16xf32>
    %42 = vector.broadcast %41 : vector<1x16xf32> to vector<128x16xf32>
    %43 = arith.addf %40, %42 : vector<128x16xf32>
    %cst_32 = arith.constant 0.000000e+00 : f32
    %44 = vector.broadcast %cst_32 : f32 to vector<128x16xf32>
    %45 = arith.maximumf %43, %44 : vector<128x16xf32>
    %cst_33 = arith.constant 0.000000e+00 : f32
    %46 = vector.broadcast %cst_33 : f32 to vector<8x1x16xf32>
    %c0_34 = arith.constant 0 : index
    %c0_35 = arith.constant 0 : index
    %c0_36 = arith.constant 0 : index
    %47 = vector.load %arg7[%c0_34, %c0_35, %c0_36] : memref<8x18x16xf32, #tpu.memory_space<vmem>>, vector<8x1x16xf32>
    tpu.vector_store %arg7[%c0_34, %c0_35, %c0_36], %46 {strides = array<i32>} : memref<8x18x16xf32, #tpu.memory_space<vmem>>, vector<8x1x16xf32>,
    %cst_37 = arith.constant 0.000000e+00 : f32
    %48 = vector.broadcast %cst_37 : f32 to vector<8x1x16xf32>
    %c0_38 = arith.constant 0 : index
    %c17_39 = arith.constant 17 : index
    %c0_40 = arith.constant 0 : index
    %49 = vector.load %arg7[%c0_38, %c17_39, %c0_40] : memref<8x18x16xf32, #tpu.memory_space<vmem>>, vector<8x1x16xf32>
    tpu.vector_store %arg7[%c0_38, %c17_39, %c0_40], %48 {strides = array<i32>} : memref<8x18x16xf32, #tpu.memory_space<vmem>>, vector<8x1x16xf32>,
    %50 = vector.shape_cast %45 : vector<128x16xf32> to vector<8x16x16xf32>
    %c0_41 = arith.constant 0 : index
    %c1_42 = arith.constant 1 : index
    %c0_43 = arith.constant 0 : index
    %51 = vector.load %arg7[%c0_41, %c1_42, %c0_43] : memref<8x18x16xf32, #tpu.memory_space<vmem>>, vector<8x16x16xf32>
    tpu.vector_store %arg7[%c0_41, %c1_42, %c0_43], %50 {strides = array<i32>} : memref<8x18x16xf32, #tpu.memory_space<vmem>>, vector<8x16x16xf32>,
    %c0_44 = arith.constant 0 : index
    %c0_45 = arith.constant 0 : index
    %c0_46 = arith.constant 0 : index
    %52 = vector.load %arg7[%c0_44, %c0_45, %c0_46] : memref<8x18x16xf32, #tpu.memory_space<vmem>>, vector<8x16x16xf32>
    %c0_47 = arith.constant 0 : index
    %c1_48 = arith.constant 1 : index
    %c0_49 = arith.constant 0 : index
    %53 = vector.load %arg7[%c0_47, %c1_48, %c0_49] : memref<8x18x16xf32, #tpu.memory_space<vmem>>, vector<8x16x16xf32>
    %c0_50 = arith.constant 0 : index
    %c2_51 = arith.constant 2 : index
    %c0_52 = arith.constant 0 : index
    %54 = vector.load %arg7[%c0_50, %c2_51, %c0_52] : memref<8x18x16xf32, #tpu.memory_space<vmem>>, vector<8x16x16xf32>
    %55 = tpu.concatenate %52, %53, %54 in 2 : vector<8x16x16xf32>, vector<8x16x16xf32>, vector<8x16x16xf32> -> vector<8x16x48xf32>
    %56 = vector.shape_cast %55 : vector<8x16x48xf32> to vector<128x48xf32>
    %57 = vector.extract_strided_slice %0 {offsets = [48, 0], sizes = [48, 16], strides = [1, 1]} : vector<112x16xf32> to vector<48x16xf32>
    %cst_53 = arith.constant dense<0.000000e+00> : vector<128x16xf32>
    %58 = tpu.matmul %56, %57, %cst_53 {dimension_numbers = #tpu.dot_dimension_numbers<[1], [0], [0], [1], [0, 0, 1, 1], [], []>} : vector<128x48xf32>, vector<48x16xf32>, vector<128x16xf32> -> vector<128x16xf32>
    %59 = vector.extract_strided_slice %1 {offsets = [4, 0], sizes = [1, 16], strides = [1, 1]} : vector<16x16xf32> to vector<1x16xf32>
    %60 = vector.broadcast %59 : vector<1x16xf32> to vector<128x16xf32>
    %61 = arith.mulf %58, %60 : vector<128x16xf32>
    %62 = vector.extract_strided_slice %1 {offsets = [5, 0], sizes = [1, 16], strides = [1, 1]} : vector<16x16xf32> to vector<1x16xf32>
    %63 = vector.broadcast %62 : vector<1x16xf32> to vector<128x16xf32>
    %64 = arith.addf %61, %63 : vector<128x16xf32>
    %cst_54 = arith.constant 0.000000e+00 : f32
    %65 = vector.broadcast %cst_54 : f32 to vector<128x16xf32>
    %66 = arith.maximumf %64, %65 : vector<128x16xf32>
    %c0_55 = arith.constant 0 : index
    %c0_56 = arith.constant 0 : index
    %67 = vector.load %arg8[%c0_55, %c0_56] : memref<128x16xf32, #tpu.memory_space<vmem>>, vector<128x16xf32>
    tpu.vector_store %arg8[%c0_55, %c0_56], %66 {strides = array<i32>} : memref<128x16xf32, #tpu.memory_space<vmem>>, vector<128x16xf32>,
    %c0_57 = arith.constant 0 : index
    %c0_58 = arith.constant 0 : index
    %68 = tpu.strided_load %arg8[%c0_57, %c0_58] {strides = array<i32: 2, 1>} : memref<128x16xf32, #tpu.memory_space<vmem>>, vector<64x16xf32>
    %c1_59 = arith.constant 1 : index
    %c0_60 = arith.constant 0 : index
    %69 = tpu.strided_load %arg8[%c1_59, %c0_60] {strides = array<i32: 2, 1>} : memref<128x16xf32, #tpu.memory_space<vmem>>, vector<64x16xf32>
    %70 = arith.maximumf %68, %69 : vector<64x16xf32>
    %71 = vector.extract_strided_slice %0 {offsets = [96, 0], sizes = [16, 4], strides = [1, 1]} : vector<112x16xf32> to vector<16x4xf32>
    %cst_61 = arith.constant dense<0.000000e+00> : vector<64x4xf32>
    %72 = tpu.matmul %70, %71, %cst_61 {dimension_numbers = #tpu.dot_dimension_numbers<[1], [0], [0], [1], [0, 0, 1, 1], [], []>} : vector<64x16xf32>, vector<16x4xf32>, vector<64x4xf32> -> vector<64x4xf32>
    %73 = vector.extract_strided_slice %1 {offsets = [6, 0], sizes = [1, 4], strides = [1, 1]} : vector<16x16xf32> to vector<1x4xf32>
    %74 = vector.broadcast %73 : vector<1x4xf32> to vector<64x4xf32>
    %75 = arith.addf %72, %74 : vector<64x4xf32>
    %76 = math.tanh %75 : vector<64x4xf32>
    %77 = vector.extract_strided_slice %1 {offsets = [7, 0], sizes = [1, 4], strides = [1, 1]} : vector<16x16xf32> to vector<1x4xf32>
    %78 = vector.broadcast %77 : vector<1x4xf32> to vector<64x4xf32>
    %79 = arith.mulf %76, %78 : vector<64x4xf32>
    %cst_62 = arith.constant dense<0.000000e+00> : vector<64xf32>
    %80 = vector.multi_reduction <add>, %79, %cst_62 [1] : vector<64x4xf32> to vector<64xf32>
    %81 = vector.shape_cast %80 : vector<64xf32> to vector<64x1xf32>
    %82 = vector.shape_cast %81 : vector<64x1xf32> to vector<8x8x1xf32>
    %cst_63 = arith.constant dense<0xFF800000> : vector<8x1xf32>
    %83 = vector.multi_reduction <maximumf>, %82, %cst_63 [1] : vector<8x8x1xf32> to vector<8x1xf32>
    %84 = vector.shape_cast %83 : vector<8x1xf32> to vector<8x1x1xf32>
    %85 = vector.broadcast %84 : vector<8x1x1xf32> to vector<8x8x1xf32>
    %86 = arith.subf %82, %85 : vector<8x8x1xf32>
    %87 = math.exp %86 : vector<8x8x1xf32>
    %cst_64 = arith.constant dense<0.000000e+00> : vector<8x1xf32>
    %88 = vector.multi_reduction <add>, %87, %cst_64 [1] : vector<8x8x1xf32> to vector<8x1xf32>
    %89 = vector.shape_cast %88 : vector<8x1xf32> to vector<8x1x1xf32>
    %90 = vector.broadcast %89 : vector<8x1x1xf32> to vector<8x8x1xf32>
    %91 = arith.divf %87, %90 : vector<8x8x1xf32>
    %92 = vector.shape_cast %70 : vector<64x16xf32> to vector<8x8x16xf32>
    %93 = vector.broadcast %91 : vector<8x8x1xf32> to vector<8x8x16xf32>
    %94 = arith.mulf %92, %93 : vector<8x8x16xf32>
    %cst_65 = arith.constant dense<0.000000e+00> : vector<8x16xf32>
    %95 = vector.multi_reduction <add>, %94, %cst_65 [1] : vector<8x8x16xf32> to vector<8x16xf32>
    %96 = vector.extract_strided_slice %1 {offsets = [8, 0], sizes = [1, 16], strides = [1, 1]} : vector<16x16xf32> to vector<1x16xf32>
    %97 = vector.broadcast %96 : vector<1x16xf32> to vector<8x16xf32>
    %98 = arith.mulf %95, %97 : vector<8x16xf32>
    %cst_66 = arith.constant dense<0.000000e+00> : vector<8xf32>
    %99 = vector.multi_reduction <add>, %98, %cst_66 [1] : vector<8x16xf32> to vector<8xf32>
    %100 = vector.shape_cast %99 : vector<8xf32> to vector<8x1xf32>
    %101 = vector.extract_strided_slice %1 {offsets = [9, 0], sizes = [1, 1], strides = [1, 1]} : vector<16x16xf32> to vector<1x1xf32>
    %102 = vector.broadcast %101 : vector<1x1xf32> to vector<8x1xf32>
    %103 = arith.addf %100, %102 : vector<8x1xf32>
    %c0_67 = arith.constant 0 : index
    %c0_68 = arith.constant 0 : index
    %104 = vector.load %arg4[%c0_67, %c0_68] : memref<8x1xf32, #tpu.memory_space<vmem>>, vector<8x1xf32>
    tpu.vector_store %arg4[%c0_67, %c0_68], %103 {strides = array<i32>} : memref<8x1xf32, #tpu.memory_space<vmem>>, vector<8x1xf32>,
    return
  }
  func.func @transform_0(%arg0: i32) -> (i32, i32, i32) {
    %c0_i32 = arith.constant 0 : i32
    %c0_i32_0 = arith.constant 0 : i32
    %c0_i32_1 = arith.constant 0 : i32
    return %arg0, %c0_i32, %c0_i32_0 : i32, i32, i32
  }
  func.func @transform_1(%arg0: i32) -> (i32, i32) {
    %c0_i32 = arith.constant 0 : i32
    %c0_i32_0 = arith.constant 0 : i32
    %c0_i32_1 = arith.constant 0 : i32
    return %c0_i32, %c0_i32_0 : i32, i32
  }
  func.func @transform_2(%arg0: i32) -> (i32, i32) {
    %c0_i32 = arith.constant 0 : i32
    %c0_i32_0 = arith.constant 0 : i32
    %c0_i32_1 = arith.constant 0 : i32
    return %c0_i32, %c0_i32_0 : i32, i32
  }
  func.func @transform_3(%arg0: i32) -> (i32, i32) {
    %c0_i32 = arith.constant 0 : i32
    %c0_i32_0 = arith.constant 0 : i32
    return %arg0, %c0_i32 : i32, i32
  }
}

</mosaic_0001>

<llo_original>
// kernel: forward.1
$region0: #{forward.1}
  #allocation0 [shape = 'u32[]', space=smem, size = 0x4, offset = 0x4, fixed_abs, tag = 'smem constant byte address 0x4 - core index']
  #allocation1 [shape = 'u32[144,128]{1,0:T(1,128)}', space=vmem, size = 0x12000, scoped, tag = 'internal scratch']
  #allocation2 [shape = 'f32[256,8]{1,0:T(8,128)}', space=vmem, size = 0x20000, scoped, tag = 'scratch operand']
  #allocation3 [shape = 'f32[8,18,8]{2,1,0:T(8,128)}', space=vmem, size = 0x18000, scoped, tag = 'scratch operand']
  #allocation4 [shape = 'f32[8,18,16]{2,1,0:T(8,128)}', space=vmem, size = 0x18000, scoped, tag = 'scratch operand']
  #allocation5 [shape = 'f32[128,16]{1,0:T(8,128)}', space=vmem, size = 0x10000, scoped, tag = 'scratch operand']
  %s0 = inlined_call_operand.vmem [shape: f32[16,34,8], index: 0, kind: input, shape index: {}]
  %s1 = inlined_call_operand.vmem [shape: f32[112,16], index: 1, kind: input, shape index: {}]
  %s2 = inlined_call_operand.vmem [shape: f32[16,16], index: 2, kind: input, shape index: {}]
  %s3 = inlined_call_operand.vmem [shape: f32[16,1], index: 3, kind: output, shape index: {}]
  %s4 = sld [smem:[#allocation0]]
  $region45: #{forward.1} parent=0
    _
  %s6 = ssub.s32 1, %s4
  %s7 = scalar_select 0, %s6, %s4
  loop: start=0, step=1, limit=4
  $region2: #{forward.1} parent=0 // loop_pre_header
    _
  $region3: #{forward.1} parent=0 // loop_header
    %s9 = sphi 0, %s13
    %p10 = scmp.ge.s32.totalorder %s9, 4
    %s19 = sphi 0, %s21
    %s22 = sphi 0, %s19
    %s23 = sphi 0, %s22
    %s39 = sphi 0, %s23
    %s43 = sphi 0, %s43
    %s45 = sphi 0, %s43
    %s46 = sphi 0, %s45
    %s60 = sphi 0, %s46
    %s64 = sphi 0, %s64
    %s66 = sphi 0, %s64
    %s67 = sphi 0, %s66
    %s81 = sphi 0, %s67
    %s87 = sphi 0, %s89
    %s90 = sphi 0, %s87
    %s91 = sphi 0, %s90
    %s107 = sphi 0, %s91
  $region4: #{forward.1} parent=0 // loop_header_branch
    %12 = sbr.rel (%p10) target = $region8
  $region5: #{forward.1} parent=0 // loop_body
    %s14 = ssub.s32 %s9, 1
    %s15 = ssub.s32 %s9, 2
    %s16 = sadd.s32 %s9, 1
    %s17 = ssub.s32 %s9, %s16
    %p18 = scmp.eq.s32.totalorder %s17, 0
    %s20 = sadd.s32 %s19, 1
    %s21 = scalar_select %p18, %s19, %s20
    %p24 = pneg %p18
    %p25 = scmp.eq.s32.totalorder %s9, 1
    %p26 = por %p24, %p25
    %p27 = scmp.ne.s32.totalorder %s19, %s22
    %p28 = scmp.eq.s32.totalorder %s9, 0
    %p29 = por %p27, %p28
    %p30 = scmp.ne.s32.totalorder %s19, %s22
    %p31 = scmp.eq.s32.totalorder %s14, 1
    %p32 = por %p30, %p31
    %p33 = scmp.ne.s32.totalorder %s22, %s23
    %p34 = scmp.eq.s32.totalorder %s14, 0
    %p35 = por %p33, %p34
    %p36 = scmp.ne.s32.totalorder %s22, %s23
    %p37 = scmp.eq.s32.totalorder %s15, 1
    %p38 = por %p36, %p37
    %p40 = scmp.ne.s32.totalorder %s23, %s39
    %p41 = scmp.eq.s32.totalorder %s15, 0
    %p42 = por %p40, %p41
    %s44 = sadd.s32 %s43, 1
    %p47 = scmp.eq.s32.totalorder %s9, 1
    %p48 = scmp.ne.s32.totalorder %s43, %s45
    %p49 = scmp.eq.s32.totalorder %s9, 0
    %p50 = por %p48, %p49
    %p51 = scmp.ne.s32.totalorder %s43, %s45
    %p52 = scmp.eq.s32.totalorder %s14, 1
    %p53 = por %p51, %p52
    %p54 = scmp.ne.s32.totalorder %s45, %s46
    %p55 = scmp.eq.s32.totalorder %s14, 0
    %p56 = por %p54, %p55
    %p57 = scmp.ne.s32.totalorder %s45, %s46
    %p58 = scmp.eq.s32.totalorder %s15, 1
    %p59 = por %p57, %p58
    %p61 = scmp.ne.s32.totalorder %s46, %s60
    %p62 = scmp.eq.s32.totalorder %s15, 0
    %p63 = por %p61, %p62
    %s65 = sadd.s32 %s64, 1
    %p68 = scmp.eq.s32.totalorder %s9, 1
    %p69 = scmp.ne.s32.totalorder %s64, %s66
    %p70 = scmp.eq.s32.totalorder %s9, 0
    %p71 = por %p69, %p70
    %p72 = scmp.ne.s32.totalorder %s64, %s66
    %p73 = scmp.eq.s32.totalorder %s14, 1
    %p74 = por %p72, %p73
    %p75 = scmp.ne.s32.totalorder %s66, %s67
    %p76 = scmp.eq.s32.totalorder %s14, 0
    %p77 = por %p75, %p76
    %p78 = scmp.ne.s32.totalorder %s66, %s67
    %p79 = scmp.eq.s32.totalorder %s15, 1
    %p80 = por %p78, %p79
    %p82 = scmp.ne.s32.totalorder %s67, %s81
    %p83 = scmp.eq.s32.totalorder %s15, 0
    %p84 = por %p82, %p83
    %s85 = ssub.s32 %s9, %s16
    %p86 = scmp.eq.s32.totalorder %s85, 0
    %s88 = sadd.s32 %s87, 1
    %s89 = scalar_select %p86, %s87, %s88
    %p92 = pneg %p86
    %p93 = scmp.eq.s32.totalorder %s9, 1
    %p94 = por %p92, %p93
    %p95 = scmp.ne.s32.totalorder %s87, %s90
    %p96 = scmp.eq.s32.totalorder %s9, 0
    %p97 = por %p95, %p96
    %p98 = scmp.ne.s32.totalorder %s87, %s90
    %p99 = scmp.eq.s32.totalorder %s14, 1
    %p100 = por %p98, %p99
    %p101 = scmp.ne.s32.totalorder %s90, %s91
    %p102 = scmp.eq.s32.totalorder %s14, 0
    %p103 = por %p101, %p102
    %p104 = scmp.ne.s32.totalorder %s90, %s91
    %p105 = scmp.eq.s32.totalorder %s15, 1
    %p106 = por %p104, %p105
    %p108 = scmp.ne.s32.totalorder %s91, %s107
    %p109 = scmp.eq.s32.totalorder %s15, 0
    %p110 = por %p108, %p109
    %p111 = scmp.le.s32.totalorder 1, %s9
    %p112 = scmp.lt.s32.totalorder %s9, 3
    %p113 = pnand %p111, %p112
    %p114 = pneg %p113
    // Predicated region
    $region9: #{forward.1} parent=5 // pred_check
      _
    $region10: #{forward.1} parent=5 // pred_check_branch
      %116 = sbr.rel (%p113) target = $region12
    $region11: #{forward.1} parent=5 // pred_region
      %s117 = ssub.s32 %s9, 1
      // Predicated region
      $region13: #{forward.1} parent=11 // pred_check
        %p118 = pneg %p56
      $region14: #{forward.1} parent=11 // pred_check_branch
        %120 = sbr.rel (%p118) target = $region16
      $region15: #{forward.1} parent=11 // pred_region
        _
      $region16: #{forward.1} parent=11 // pred_fallthru
        _
      // Predicated region
      $region17: #{forward.1} parent=11 // pred_check
        %p121 = pneg %p77
      $region18: #{forward.1} parent=11 // pred_check_branch
        %123 = sbr.rel (%p121) target = $region20
      $region19: #{forward.1} parent=11 // pred_region
        _
      $region20: #{forward.1} parent=11 // pred_fallthru
        _
    $region12: #{forward.1} parent=5 // pred_fallthru
      _
    %p124 = scmp.lt.s32.totalorder %s9, 2
    // Predicated region
    $region21: #{forward.1} parent=5 // pred_check
      %p125 = pneg %p124
    $region22: #{forward.1} parent=5 // pred_check_branch
      %127 = sbr.rel (%p125) target = $region24
    $region23: #{forward.1} parent=5 // pred_region
      // Predicated region
      $region25: #{forward.1} parent=23 // pred_check
        %p128 = pneg %p29
      $region26: #{forward.1} parent=23 // pred_check_branch
        %130 = sbr.rel (%p128) target = $region28
      $region27: #{forward.1} parent=23 // pred_region
        %s131 = smul.u32 8, %s9
        %p132 = scmp.lt.s32.totalorder %s131, 15
        %s133 = scalar_select %p132, %s131, 15
        %s134 = smul.addr %s133, 5
        %s135 = smul.addr %s134, 8
        %s136 = scalar_lea.vmem %s0, %s135
        %s137 = smul.u32 8, %s9
      $region28: #{forward.1} parent=23 // pred_fallthru
        _
    $region24: #{forward.1} parent=5 // pred_fallthru
      _
    %p138 = scmp.le.s32.totalorder 1, %s9
    %p139 = scmp.lt.s32.totalorder %s9, 3
    %p140 = pnand %p138, %p139
    %p141 = pneg %p140
    // Predicated region
    $region29: #{forward.1} parent=5 // pred_check
      _
    $region30: #{forward.1} parent=5 // pred_check_branch
      %143 = sbr.rel (%p140) target = $region32
    $region31: #{forward.1} parent=5 // pred_region
      %s144 = ssub.s32 %s9, 1
      %s145 = smul.u32 8, %s14
      %p146 = scmp.lt.s32.totalorder %s145, 15
      %s147 = scalar_select %p146, %s145, 15
      %s148 = smul.addr %s147, 5
      %s149 = smul.addr %s148, 8
      %s150 = scalar_lea.vmem %s0, %s149
      %p151 = pneg %p35
      %p152 = pneg %p32
      %p153 = pneg %p56
      %p154 = pneg %p53
      %p155 = pneg %p77
      %p156 = pneg %p74
      %p157 = pneg %p103
      %p158 = pneg %p100
      %p159 = scmp.lt.s32.totalorder %s14, 1
      %s160 = scalar_select %p159, %s14, 1
      %s161 = smul.addr %s160, 8
      %s162 = scalar_lea.vmem %s3, %s161
      %s163 = smul.u32 8, %s14
      %p164 = scmp.lt.s32.totalorder %s163, 15
      %s165 = scalar_select %p164, %s163, 15
      %s166 = smul.addr %s165, 5
      %s167 = smul.addr %s166, 8
      %s168 = scalar_lea.vmem %s0, %s167
      %s169 = smul.u32 8, %s14
      %p170 = scmp.lt.s32.totalorder %s14, 1
      %s171 = scalar_select %p170, %s14, 1
      %s172 = smul.addr %s171, 8
      %s173 = scalar_lea.vmem %s3, %s172
      %v174 = vld [vmem:[%s1] sm:$0xff]
      %v175 = vld [vmem:[%s1 + $0x8] sm:$0xff]
      %v176 = vld [vmem:[%s1 + $0x10] sm:$0xff]
      %v177 = vld [vmem:[%s1 + $0x18] sm:$0xff]
      %v178 = vld [vmem:[%s1 + $0x20] sm:$0xff]
      %v179 = vld [vmem:[%s1 + $0x28] sm:$0xff]
      %v180 = vld [vmem:[%s1 + $0x30] sm:$0xff]
      %v181 = vld [vmem:[%s1 + $0x38] sm:$0xff]
      %v182 = vld [vmem:[%s1 + $0x40] sm:$0xff]
      %v183 = vld [vmem:[%s1 + $0x48] sm:$0xff]
      %v184 = vld [vmem:[%s1 + $0x50] sm:$0xff]
      %v185 = vld [vmem:[%s1 + $0x58] sm:$0xff]
      %v186 = vld [vmem:[%s1 + $0x60] sm:$0xff]
      %v187 = vld [vmem:[%s1 + $0x68] sm:$0xff]
      %v188 = vld [vmem:[%s2] sm:$0xff]
      %v189 = vld [vmem:[%s2 + $0x8] sm:$0xff]
      %v190 = vld [vmem:[%s168] sm:$0xff]
      %v191 = vld [vmem:[%s168 + $0x8] sm:$0xff]
      %v192 = vld [vmem:[%s168 + $0x10] sm:$0xff]
      %v193 = vld [vmem:[%s168 + $0x18] sm:$0xff]
      %v194 = vld [vmem:[%s168 + $0x20] sm:$0x3]
      %v195 = vld [vmem:[%s168 + $0x28] sm:$0xff]
      %v196 = vld [vmem:[%s168 + $0x30] sm:$0xff]
      %v197 = vld [vmem:[%s168 + $0x38] sm:$0xff]
      %v198 = vld [vmem:[%s168 + $0x40] sm:$0xff]
      %v199 = vld [vmem:[%s168 + $0x48] sm:$0x3]
      %v200 = vld [vmem:[%s168 + $0x50] sm:$0xff]
      %v201 = vld [vmem:[%s168 + $0x58] sm:$0xff]
      %v202 = vld [vmem:[%s168 + $0x60] sm:$0xff]
      %v203 = vld [vmem:[%s168 + $0x68] sm:$0xff]
      %v204 = vld [vmem:[%s168 + $0x70] sm:$0x3]
      %v205 = vld [vmem:[%s168 + $0x78] sm:$0xff]
      %v206 = vld [vmem:[%s168 + $0x80] sm:$0xff]
      %v207 = vld [vmem:[%s168 + $0x88] sm:$0xff]
      %v208 = vld [vmem:[%s168 + $0x90] sm:$0xff]
      %v209 = vld [vmem:[%s168 + $0x98] sm:$0x3]
      %v210 = vld [vmem:[%s168 + $0xa0] sm:$0xff]
      %v211 = vld [vmem:[%s168 + $0xa8] sm:$0xff]
      %v212 = vld [vmem:[%s168 + $0xb0] sm:$0xff]
      %v213 = vld [vmem:[%s168 + $0xb8] sm:$0xff]
      %v214 = vld [vmem:[%s168 + $0xc0] sm:$0x3]
      %v215 = vld [vmem:[%s168 + $0xc8] sm:$0xff]
      %v216 = vld [vmem:[%s168 + $0xd0] sm:$0xff]
      %v217 = vld [vmem:[%s168 + $0xd8] sm:$0xff]
      %v218 = vld [vmem:[%s168 + $0xe0] sm:$0xff]
      %v219 = vld [vmem:[%s168 + $0xe8] sm:$0x3]
      %v220 = vld [vmem:[%s168 + $0xf0] sm:$0xff]
      %v221 = vld [vmem:[%s168 + $0xf8] sm:$0xff]
      %v222 = vld [vmem:[%s168 + $0x100] sm:$0xff]
      %v223 = vld [vmem:[%s168 + $0x108] sm:$0xff]
      %v224 = vld [vmem:[%s168 + $0x110] sm:$0x3]
      %v225 = vld [vmem:[%s168 + $0x118] sm:$0xff]
      %v226 = vld [vmem:[%s168 + $0x120] sm:$0xff]
      %v227 = vld [vmem:[%s168 + $0x128] sm:$0xff]
      %v228 = vld [vmem:[%s168 + $0x130] sm:$0xff]
      %v229 = vld [vmem:[%s168 + $0x138] sm:$0x3]
      %vm270 = vcmask 1046528
      %v271 = vrot.slane %v190, 1
      %v272 = vrot.slane %v191, 1
      %v273 = vsel %vm270, %v271, %v272
      %v274 = vrot.slane %v192, 1
      %v275 = vsel %vm270, %v272, %v274
      %v276 = vrot.slane %v193, 1
      %v277 = vsel %vm270, %v274, %v276
      %v278 = vrot.slane %v194, 1
      %v279 = vsel %vm270, %v276, %v278
      %v280 = vrot.slane %v195, 1
      %v281 = vrot.slane %v196, 1
      %v282 = vsel %vm270, %v280, %v281
      %v283 = vrot.slane %v197, 1
      %v284 = vsel %vm270, %v281, %v283
      %v285 = vrot.slane %v198, 1
      %v286 = vsel %vm270, %v283, %v285
      %v287 = vrot.slane %v199, 1
      %v288 = vsel %vm270, %v285, %v287
      %v289 = vrot.slane %v200, 1
      %v290 = vrot.slane %v201, 1
      %v291 = vsel %vm270, %v289, %v290
      %v292 = vrot.slane %v202, 1
      %v293 = vsel %vm270, %v290, %v292
      %v294 = vrot.slane %v203, 1
      %v295 = vsel %vm270, %v292, %v294
      %v296 = vrot.slane %v204, 1
      %v297 = vsel %vm270, %v294, %v296
      %v298 = vrot.slane %v205, 1
      %v299 = vrot.slane %v206, 1
      %v300 = vsel %vm270, %v298, %v299
      %v301 = vrot.slane %v207, 1
      %v302 = vsel %vm270, %v299, %v301
      %v303 = vrot.slane %v208, 1
      %v304 = vsel %vm270, %v301, %v303
      %v305 = vrot.slane %v209, 1
      %v306 = vsel %vm270, %v303, %v305
      %v307 = vrot.slane %v210, 1
      %v308 = vrot.slane %v211, 1
      %v309 = vsel %vm270, %v307, %v308
      %v310 = vrot.slane %v212, 1
      %v311 = vsel %vm270, %v308, %v310
      %v312 = vrot.slane %v213, 1
      %v313 = vsel %vm270, %v310, %v312
      %v314 = vrot.slane %v214, 1
      %v315 = vsel %vm270, %v312, %v314
      %v316 = vrot.slane %v215, 1
      %v317 = vrot.slane %v216, 1
      %v318 = vsel %vm270, %v316, %v317
      %v319 = vrot.slane %v217, 1
      %v320 = vsel %vm270, %v317, %v319
      %v321 = vrot.slane %v218, 1
      %v322 = vsel %vm270, %v319, %v321
      %v323 = vrot.slane %v219, 1
      %v324 = vsel %vm270, %v321, %v323
      %v325 = vrot.slane %v220, 1
      %v326 = vrot.slane %v221, 1
      %v327 = vsel %vm270, %v325, %v326
      %v328 = vrot.slane %v222, 1
      %v329 = vsel %vm270, %v326, %v328
      %v330 = vrot.slane %v223, 1
      %v331 = vsel %vm270, %v328, %v330
      %v332 = vrot.slane %v224, 1
      %v333 = vsel %vm270, %v330, %v332
      %v334 = vrot.slane %v225, 1
      %v335 = vrot.slane %v226, 1
      %v336 = vsel %vm270, %v334, %v335
      %v337 = vrot.slane %v227, 1
      %v338 = vsel %vm270, %v335, %v337
      %v339 = vrot.slane %v228, 1
      %v340 = vsel %vm270, %v337, %v339
      %v341 = vrot.slane %v229, 1
      %v342 = vsel %vm270, %v339, %v341
      %343 = vrot.lane.b32.xlu0 %v273, 8
      %v344 = vpop.permute.xlu0 %343
      %345 = vrot.lane.b32.xlu0 %v275, 8
      %v346 = vpop.permute.xlu0 %345
      %347 = vrot.lane.b32.xlu0 %v277, 8
      %v348 = vpop.permute.xlu0 %347
      %349 = vrot.lane.b32.xlu0 %v279, 8
      %v350 = vpop.permute.xlu0 %349
      %351 = vrot.lane.b32.xlu0 %v282, 8
      %v352 = vpop.permute.xlu0 %351
      %353 = vrot.lane.b32.xlu0 %v284, 8
      %v354 = vpop.permute.xlu0 %353
      %355 = vrot.lane.b32.xlu0 %v286, 8
      %v356 = vpop.permute.xlu0 %355
      %357 = vrot.lane.b32.xlu0 %v288, 8
      %v358 = vpop.permute.xlu0 %357
      %359 = vrot.lane.b32.xlu0 %v291, 8
      %v360 = vpop.permute.xlu0 %359
      %361 = vrot.lane.b32.xlu0 %v293, 8
      %v362 = vpop.permute.xlu0 %361
      %363 = vrot.lane.b32.xlu0 %v295, 8
      %v364 = vpop.permute.xlu0 %363
      %365 = vrot.lane.b32.xlu0 %v297, 8
      %v366 = vpop.permute.xlu0 %365
      %367 = vrot.lane.b32.xlu0 %v300, 8
      %v368 = vpop.permute.xlu0 %367
      %369 = vrot.lane.b32.xlu0 %v302, 8
      %v370 = vpop.permute.xlu0 %369
      %371 = vrot.lane.b32.xlu0 %v304, 8
      %v372 = vpop.permute.xlu0 %371
      %373 = vrot.lane.b32.xlu0 %v306, 8
      %v374 = vpop.permute.xlu0 %373
      %375 = vrot.lane.b32.xlu0 %v309, 8
      %v376 = vpop.permute.xlu0 %375
      %377 = vrot.lane.b32.xlu0 %v311, 8
      %v378 = vpop.permute.xlu0 %377
      %379 = vrot.lane.b32.xlu0 %v313, 8
      %v380 = vpop.permute.xlu0 %379
      %381 = vrot.lane.b32.xlu0 %v315, 8
      %v382 = vpop.permute.xlu0 %381
      %383 = vrot.lane.b32.xlu0 %v318, 8
      %v384 = vpop.permute.xlu0 %383
      %385 = vrot.lane.b32.xlu0 %v320, 8
      %v386 = vpop.permute.xlu0 %385
      %387 = vrot.lane.b32.xlu0 %v322, 8
      %v388 = vpop.permute.xlu0 %387
      %389 = vrot.lane.b32.xlu0 %v324, 8
      %v390 = vpop.permute.xlu0 %389
      %391 = vrot.lane.b32.xlu0 %v327, 8
      %v392 = vpop.permute.xlu0 %391
      %393 = vrot.lane.b32.xlu0 %v329, 8
      %v394 = vpop.permute.xlu0 %393
      %395 = vrot.lane.b32.xlu0 %v331, 8
      %v396 = vpop.permute.xlu0 %395
      %397 = vrot.lane.b32.xlu0 %v333, 8
      %v398 = vpop.permute.xlu0 %397
      %399 = vrot.lane.b32.xlu0 %v336, 8
      %v400 = vpop.permute.xlu0 %399
      %401 = vrot.lane.b32.xlu0 %v338, 8
      %v402 = vpop.permute.xlu0 %401
      %403 = vrot.lane.b32.xlu0 %v340, 8
      %v404 = vpop.permute.xlu0 %403
      %405 = vrot.lane.b32.xlu0 %v342, 8
      %v406 = vpop.permute.xlu0 %405
      %vm439 = vcmask 1045504
      %v440 = vrot.slane %v190, 2
      %v441 = vrot.slane %v191, 2
      %v442 = vsel %vm439, %v440, %v441
      %v443 = vrot.slane %v192, 2
      %v444 = vsel %vm439, %v441, %v443
      %v445 = vrot.slane %v193, 2
      %v446 = vsel %vm439, %v443, %v445
      %v447 = vrot.slane %v194, 2
      %v448 = vsel %vm439, %v445, %v447
      %v449 = vrot.slane %v195, 2
      %v450 = vrot.slane %v196, 2
      %v451 = vsel %vm439, %v449, %v450
      %v452 = vrot.slane %v197, 2
      %v453 = vsel %vm439, %v450, %v452
      %v454 = vrot.slane %v198, 2
      %v455 = vsel %vm439, %v452, %v454
      %v456 = vrot.slane %v199, 2
      %v457 = vsel %vm439, %v454, %v456
      %v458 = vrot.slane %v200, 2
      %v459 = vrot.slane %v201, 2
      %v460 = vsel %vm439, %v458, %v459
      %v461 = vrot.slane %v202, 2
      %v462 = vsel %vm439, %v459, %v461
      %v463 = vrot.slane %v203, 2
      %v464 = vsel %vm439, %v461, %v463
      %v465 = vrot.slane %v204, 2
      %v466 = vsel %vm439, %v463, %v465
      %v467 = vrot.slane %v205, 2
      %v468 = vrot.slane %v206, 2
      %v469 = vsel %vm439, %v467, %v468
      %v470 = vrot.slane %v207, 2
      %v471 = vsel %vm439, %v468, %v470
      %v472 = vrot.slane %v208, 2
      %v473 = vsel %vm439, %v470, %v472
      %v474 = vrot.slane %v209, 2
      %v475 = vsel %vm439, %v472, %v474
      %v476 = vrot.slane %v210, 2
      %v477 = vrot.slane %v211, 2
      %v478 = vsel %vm439, %v476, %v477
      %v479 = vrot.slane %v212, 2
      %v480 = vsel %vm439, %v477, %v479
      %v481 = vrot.slane %v213, 2
      %v482 = vsel %vm439, %v479, %v481
      %v483 = vrot.slane %v214, 2
      %v484 = vsel %vm439, %v481, %v483
      %v485 = vrot.slane %v215, 2
      %v486 = vrot.slane %v216, 2
      %v487 = vsel %vm439, %v485, %v486
      %v488 = vrot.slane %v217, 2
      %v489 = vsel %vm439, %v486, %v488
      %v490 = vrot.slane %v218, 2
      %v491 = vsel %vm439, %v488, %v490
      %v492 = vrot.slane %v219, 2
      %v493 = vsel %vm439, %v490, %v492
      %v494 = vrot.slane %v220, 2
      %v495 = vrot.slane %v221, 2
      %v496 = vsel %vm439, %v494, %v495
      %v497 = vrot.slane %v222, 2
      %v498 = vsel %vm439, %v495, %v497
      %v499 = vrot.slane %v223, 2
      %v500 = vsel %vm439, %v497, %v499
      %v501 = vrot.slane %v224, 2
      %v502 = vsel %vm439, %v499, %v501
      %v503 = vrot.slane %v225, 2
      %v504 = vrot.slane %v226, 2
      %v505 = vsel %vm439, %v503, %v504
      %v506 = vrot.slane %v227, 2
      %v507 = vsel %vm439, %v504, %v506
      %v508 = vrot.slane %v228, 2
      %v509 = vsel %vm439, %v506, %v508
      %v510 = vrot.slane %v229, 2
      %v511 = vsel %vm439, %v508, %v510
      %512 = vrot.lane.b32.xlu0 %v442, 16
      %v513 = vpop.permute.xlu0 %512
      %514 = vrot.lane.b32.xlu0 %v444, 16
      %v515 = vpop.permute.xlu0 %514
      %516 = vrot.lane.b32.xlu0 %v446, 16
      %v517 = vpop.permute.xlu0 %516
      %518 = vrot.lane.b32.xlu0 %v448, 16
      %v519 = vpop.permute.xlu0 %518
      %520 = vrot.lane.b32.xlu0 %v451, 16
      %v521 = vpop.permute.xlu0 %520
      %522 = vrot.lane.b32.xlu0 %v453, 16
      %v523 = vpop.permute.xlu0 %522
      %524 = vrot.lane.b32.xlu0 %v455, 16
      %v525 = vpop.permute.xlu0 %524
      %526 = vrot.lane.b32.xlu0 %v457, 16
      %v527 = vpop.permute.xlu0 %526
      %528 = vrot.lane.b32.xlu0 %v460, 16
      %v529 = vpop.permute.xlu0 %528
      %530 = vrot.lane.b32.xlu0 %v462, 16
      %v531 = vpop.permute.xlu0 %530
      %532 = vrot.lane.b32.xlu0 %v464, 16
      %v533 = vpop.permute.xlu0 %532
      %534 = vrot.lane.b32.xlu0 %v466, 16
      %v535 = vpop.permute.xlu0 %534
      %536 = vrot.lane.b32.xlu0 %v469, 16
      %v537 = vpop.permute.xlu0 %536
      %538 = vrot.lane.b32.xlu0 %v471, 16
      %v539 = vpop.permute.xlu0 %538
      %540 = vrot.lane.b32.xlu0 %v473, 16
      %v541 = vpop.permute.xlu0 %540
      %542 = vrot.lane.b32.xlu0 %v475, 16
      %v543 = vpop.permute.xlu0 %542
      %544 = vrot.lane.b32.xlu0 %v478, 16
      %v545 = vpop.permute.xlu0 %544
      %546 = vrot.lane.b32.xlu0 %v480, 16
      %v547 = vpop.permute.xlu0 %546
      %548 = vrot.lane.b32.xlu0 %v482, 16
      %v549 = vpop.permute.xlu0 %548
      %550 = vrot.lane.b32.xlu0 %v484, 16
      %v551 = vpop.permute.xlu0 %550
      %552 = vrot.lane.b32.xlu0 %v487, 16
      %v553 = vpop.permute.xlu0 %552
      %554 = vrot.lane.b32.xlu0 %v489, 16
      %v555 = vpop.permute.xlu0 %554
      %556 = vrot.lane.b32.xlu0 %v491, 16
      %v557 = vpop.permute.xlu0 %556
      %558 = vrot.lane.b32.xlu0 %v493, 16
      %v559 = vpop.permute.xlu0 %558
      %560 = vrot.lane.b32.xlu0 %v496, 16
      %v561 = vpop.permute.xlu0 %560
      %562 = vrot.lane.b32.xlu0 %v498, 16
      %v563 = vpop.permute.xlu0 %562
      %564 = vrot.lane.b32.xlu0 %v500, 16
      %v565 = vpop.permute.xlu0 %564
      %566 = vrot.lane.b32.xlu0 %v502, 16
      %v567 = vpop.permute.xlu0 %566
      %568 = vrot.lane.b32.xlu0 %v505, 16
      %v569 = vpop.permute.xlu0 %568
      %570 = vrot.lane.b32.xlu0 %v507, 16
      %v571 = vpop.permute.xlu0 %570
      %572 = vrot.lane.b32.xlu0 %v509, 16
      %v573 = vpop.permute.xlu0 %572
      %574 = vrot.lane.b32.xlu0 %v511, 16
      %v575 = vpop.permute.xlu0 %574
      %vm608 = vcmask 64512
      %v609 = vsel %vm608, %v190, %v344
      %v610 = vsel %vm608, %v191, %v346
      %v611 = vsel %vm608, %v192, %v348
      %v612 = vsel %vm608, %v193, %v350
      %v613 = vsel %vm608, %v195, %v352
      %v614 = vsel %vm608, %v196, %v354
      %v615 = vsel %vm608, %v197, %v356
      %v616 = vsel %vm608, %v198, %v358
      %v617 = vsel %vm608, %v200, %v360
      %v618 = vsel %vm608, %v201, %v362
      %v619 = vsel %vm608, %v202, %v364
      %v620 = vsel %vm608, %v203, %v366
      %v621 = vsel %vm608, %v205, %v368
      %v622 = vsel %vm608, %v206, %v370
      %v623 = vsel %vm608, %v207, %v372
      %v624 = vsel %vm608, %v208, %v374
      %v625 = vsel %vm608, %v210, %v376
      %v626 = vsel %vm608, %v211, %v378
      %v627 = vsel %vm608, %v212, %v380
      %v628 = vsel %vm608, %v213, %v382
      %v629 = vsel %vm608, %v215, %v384
      %v630 = vsel %vm608, %v216, %v386
      %v631 = vsel %vm608, %v217, %v388
      %v632 = vsel %vm608, %v218, %v390
      %v633 = vsel %vm608, %v220, %v392
      %v634 = vsel %vm608, %v221, %v394
      %v635 = vsel %vm608, %v222, %v396
      %v636 = vsel %vm608, %v223, %v398
      %v637 = vsel %vm608, %v225, %v400
      %v638 = vsel %vm608, %v226, %v402
      %v639 = vsel %vm608, %v227, %v404
      %v640 = vsel %vm608, %v228, %v406
      %vm641 = vcmask 130048
      %v642 = vsel %vm641, %v609, %v513
      %v643 = vsel %vm641, %v610, %v515
      %v644 = vsel %vm641, %v611, %v517
      %v645 = vsel %vm641, %v612, %v519
      %v646 = vsel %vm641, %v613, %v521
      %v647 = vsel %vm641, %v614, %v523
      %v648 = vsel %vm641, %v615, %v525
      %v649 = vsel %vm641, %v616, %v527
      %v650 = vsel %vm641, %v617, %v529
      %v651 = vsel %vm641, %v618, %v531
      %v652 = vsel %vm641, %v619, %v533
      %v653 = vsel %vm641, %v620, %v535
      %v654 = vsel %vm641, %v621, %v537
      %v655 = vsel %vm641, %v622, %v539
      %v656 = vsel %vm641, %v623, %v541
      %v657 = vsel %vm641, %v624, %v543
      %v658 = vsel %vm641, %v625, %v545
      %v659 = vsel %vm641, %v626, %v547
      %v660 = vsel %vm641, %v627, %v549
      %v661 = vsel %vm641, %v628, %v551
      %v662 = vsel %vm641, %v629, %v553
      %v663 = vsel %vm641, %v630, %v555
      %v664 = vsel %vm641, %v631, %v557
      %v665 = vsel %vm641, %v632, %v559
      %v666 = vsel %vm641, %v633, %v561
      %v667 = vsel %vm641, %v634, %v563
      %v668 = vsel %vm641, %v635, %v565
      %v669 = vsel %vm641, %v636, %v567
      %v670 = vsel %vm641, %v637, %v569
      %v671 = vsel %vm641, %v638, %v571
      %v672 = vsel %vm641, %v639, %v573
      %v673 = vsel %vm641, %v640, %v575
      %vm674 = vcmask 195584
      %v676 = vsel %vm674, %v642, 0
      %v679 = vsel %vm674, %v643, 0
      %v682 = vsel %vm674, %v644, 0
      %v685 = vsel %vm674, %v645, 0
      %v688 = vsel %vm674, %v646, 0
      %v691 = vsel %vm674, %v647, 0
      %v694 = vsel %vm674, %v648, 0
      %v697 = vsel %vm674, %v649, 0
      %v700 = vsel %vm674, %v650, 0
      %v703 = vsel %vm674, %v651, 0
      %v706 = vsel %vm674, %v652, 0
      %v709 = vsel %vm674, %v653, 0
      %v712 = vsel %vm674, %v654, 0
      %v715 = vsel %vm674, %v655, 0
      %v718 = vsel %vm674, %v656, 0
      %v721 = vsel %vm674, %v657, 0
      %v724 = vsel %vm674, %v658, 0
      %v727 = vsel %vm674, %v659, 0
      %v730 = vsel %vm674, %v660, 0
      %v733 = vsel %vm674, %v661, 0
      %v736 = vsel %vm674, %v662, 0
      %v739 = vsel %vm674, %v663, 0
      %v742 = vsel %vm674, %v664, 0
      %v745 = vsel %vm674, %v665, 0
      %v748 = vsel %vm674, %v666, 0
      %v751 = vsel %vm674, %v667, 0
      %v754 = vsel %vm674, %v668, 0
      %v757 = vsel %vm674, %v669, 0
      %v760 = vsel %vm674, %v670, 0
      %v763 = vsel %vm674, %v671, 0
      %v766 = vsel %vm674, %v672, 0
      %v769 = vsel %vm674, %v673, 0
      %771 = vmatprep.subr.mxu0 0.0
      %772 = vmatpush1.msra.mxu0 %v174
      %773 = vmatprep.subr.mxu0 0.0
      %774 = vmatpush1.msra.mxu0 %v175
      %775 = vmatprep.subr.mxu0 0.0
      %776 = vmatpush1.msra.mxu0 %v176
      %777 = vmatprep.subr.mxu0 0.0
      %778 = vmatpush1.msra.mxu0 0.0
      %779 = vmatprep.subr.mxu0 0.0
      %780 = vmatpush1.msra.mxu0 0.0
      %781 = vmatprep.subr.mxu0 0.0
      %782 = vmatpush1.msra.mxu0 0.0
      %783 = vmatprep.subr.mxu0 0.0
      %784 = vmatpush1.msra.mxu0 0.0
      %785 = vmatprep.subr.mxu0 0.0
      %786 = vmatpush1.msra.mxu0 0.0
      %787 = vmatprep.subr.mxu0 0.0
      %788 = vmatpush1.msra.mxu0 0.0
      %789 = vmatprep.subr.mxu0 0.0
      %790 = vmatpush1.msra.mxu0 0.0
      %791 = vmatprep.subr.mxu0 0.0
      %792 = vmatpush1.msra.mxu0 0.0
      %793 = vmatprep.subr.mxu0 0.0
      %794 = vmatpush1.msra.mxu0 0.0
      %795 = vmatprep.subr.mxu0 0.0
      %796 = vmatpush1.msra.mxu0 0.0
      %797 = vmatprep.subr.mxu0 0.0
      %798 = vmatpush1.msra.mxu0 0.0
      %799 = vmatprep.subr.mxu0 0.0
      %800 = vmatpush1.msra.mxu0 0.0
      %801 = vmatprep.subr.mxu0 0.0
      %802 = vmatpush1.msra.mxu0 0.0
      %803 = vmatprep.subr.mxu0 0.0
      %804 = vmatpush1.msra.mxu0 0.0
      %805 = vmatprep.subr.mxu0 0.0
      %806 = vmatpush1.msra.mxu0 0.0
      %807 = vmatprep.subr.mxu0 0.0
      %808 = vmatpush1.msra.mxu0 0.0
      %809 = vmatprep.subr.mxu0 0.0
      %810 = vmatpush1.msra.mxu0 0.0
      %811 = vmatprep.subr.mxu0 0.0
      %812 = vmatpush1.msra.mxu0 0.0
      %813 = vmatprep.subr.mxu0 0.0
      %814 = vmatpush1.msra.mxu0 0.0
      %815 = vmatprep.subr.mxu0 0.0
      %816 = vmatpush1.msra.mxu0 0.0
      %817 = vmatprep.subr.mxu0 0.0
      %818 = vmatpush1.msra.mxu0 0.0
      %819 = vmatprep.subr.mxu0 0.0
      %820 = vmatpush1.msra.mxu0 0.0
      %821 = vmatprep.subr.mxu0 0.0
      %822 = vmatpush1.msra.mxu0 0.0
      %823 = vmatprep.subr.mxu0 0.0
      %824 = vmatpush1.msra.mxu0 0.0
      %825 = vmatprep.subr.mxu0 0.0
      %826 = vmatpush1.msra.mxu0 0.0
      %827 = vmatprep.subr.mxu0 0.0
      %828 = vmatpush1.msra.mxu0 0.0
      %829 = vmatprep.subr.mxu0 0.0
      %830 = vmatpush1.msra.mxu0 0.0
      %831 = vmatprep.subr.mxu0 0.0
      %832 = vmatpush1.msra.mxu0 0.0
      %833 = vmatprep.subr.mxu0 0.0
      %834 = vmatpush1.msra.mxu0 0.0
      %835 = vmatprep.mubr.f32.mxu0 0.0
      %836 = vmatmul.mubr.f32.gmra.mrb[0].mxu0 %v676
      %v837 = vpop.f32.mrb[0].mxu0
      %v838 = vadd.f32 0.0, %v837
      %v839 = vpop.f32.mrb[0].mxu0
      %840 = vmatprep.mubr.f32.mxu0 0.0
      %841 = vmatmul.mubr.f32.gmra.mrb[0].mxu0 %v679
      %v842 = vpop.f32.mrb[0].mxu0
      %v843 = vadd.f32 0.0, %v842
      %v844 = vpop.f32.mrb[0].mxu0
      %845 = vmatprep.mubr.f32.mxu0 0.0
      %846 = vmatmul.mubr.f32.gmra.mrb[0].mxu0 %v682
      %v847 = vpop.f32.mrb[0].mxu0
      %v848 = vadd.f32 0.0, %v847
      %v849 = vpop.f32.mrb[0].mxu0
      %850 = vmatprep.mubr.f32.mxu0 0.0
      %851 = vmatmul.mubr.f32.gmra.mrb[0].mxu0 %v685
      %v852 = vpop.f32.mrb[0].mxu0
      %v853 = vadd.f32 0.0, %v852
      %v854 = vpop.f32.mrb[0].mxu0
      %855 = vmatprep.mubr.f32.mxu0 0.0
      %856 = vmatmul.mubr.f32.gmra.mrb[0].mxu0 %v688
      %v857 = vpop.f32.mrb[0].mxu0
      %v858 = vadd.f32 0.0, %v857
      %v859 = vpop.f32.mrb[0].mxu0
      %860 = vmatprep.mubr.f32.mxu0 0.0
      %861 = vmatmul.mubr.f32.gmra.mrb[0].mxu0 %v691
      %v862 = vpop.f32.mrb[0].mxu0
      %v863 = vadd.f32 0.0, %v862
      %v864 = vpop.f32.mrb[0].mxu0
      %865 = vmatprep.mubr.f32.mxu0 0.0
      %866 = vmatmul.mubr.f32.gmra.mrb[0].mxu0 %v694
      %v867 = vpop.f32.mrb[0].mxu0
      %v868 = vadd.f32 0.0, %v867
      %v869 = vpop.f32.mrb[0].mxu0
      %870 = vmatprep.mubr.f32.mxu0 0.0
      %871 = vmatmul.mubr.f32.gmra.mrb[0].mxu0 %v697
      %v872 = vpop.f32.mrb[0].mxu0
      %v873 = vadd.f32 0.0, %v872
      %v874 = vpop.f32.mrb[0].mxu0
      %875 = vmatprep.mubr.f32.mxu0 0.0
      %876 = vmatmul.mubr.f32.gmra.mrb[0].mxu0 %v700
      %v877 = vpop.f32.mrb[0].mxu0
      %v878 = vadd.f32 0.0, %v877
      %v879 = vpop.f32.mrb[0].mxu0
      %880 = vmatprep.mubr.f32.mxu0 0.0
      %881 = vmatmul.mubr.f32.gmra.mrb[0].mxu0 %v703
      %v882 = vpop.f32.mrb[0].mxu0
      %v883 = vadd.f32 0.0, %v882
      %v884 = vpop.f32.mrb[0].mxu0
      %885 = vmatprep.mubr.f32.mxu0 0.0
      %886 = vmatmul.mubr.f32.gmra.mrb[0].mxu0 %v706
      %v887 = vpop.f32.mrb[0].mxu0
      %v888 = vadd.f32 0.0, %v887
      %v889 = vpop.f32.mrb[0].mxu0
      %890 = vmatprep.mubr.f32.mxu0 0.0
      %891 = vmatmul.mubr.f32.gmra.mrb[0].mxu0 %v709
      %v892 = vpop.f32.mrb[0].mxu0
      %v893 = vadd.f32 0.0, %v892
      %v894 = vpop.f32.mrb[0].mxu0
      %895 = vmatprep.mubr.f32.mxu0 0.0
      %896 = vmatmul.mubr.f32.gmra.mrb[0].mxu0 %v712
      %v897 = vpop.f32.mrb[0].mxu0
      %v898 = vadd.f32 0.0, %v897
      %v899 = vpop.f32.mrb[0].mxu0
      %900 = vmatprep.mubr.f32.mxu0 0.0
      %901 = vmatmul.mubr.f32.gmra.mrb[0].mxu0 %v715
      %v902 = vpop.f32.mrb[0].mxu0
      %v903 = vadd.f32 0.0, %v902
      %v904 = vpop.f32.mrb[0].mxu0
      %905 = vmatprep.mubr.f32.mxu0 0.0
      %906 = vmatmul.mubr.f32.gmra.mrb[0].mxu0 %v718
      %v907 = vpop.f32.mrb[0].mxu0
      %v908 = vadd.f32 0.0, %v907
      %v909 = vpop.f32.mrb[0].mxu0
      %910 = vmatprep.mubr.f32.mxu0 0.0
      %911 = vmatmul.mubr.f32.gmra.mrb[0].mxu0 %v721
      %v912 = vpop.f32.mrb[0].mxu0
      %v913 = vadd.f32 0.0, %v912
      %v914 = vpop.f32.mrb[0].mxu0
      %915 = vmatprep.mubr.f32.mxu0 0.0
      %916 = vmatmul.mubr.f32.gmra.mrb[0].mxu0 %v724
      %v917 = vpop.f32.mrb[0].mxu0
      %v918 = vadd.f32 0.0, %v917
      %v919 = vpop.f32.mrb[0].mxu0
      %920 = vmatprep.mubr.f32.mxu0 0.0
      %921 = vmatmul.mubr.f32.gmra.mrb[0].mxu0 %v727
      %v922 = vpop.f32.mrb[0].mxu0
      %v923 = vadd.f32 0.0, %v922
      %v924 = vpop.f32.mrb[0].mxu0
      %925 = vmatprep.mubr.f32.mxu0 0.0
      %926 = vmatmul.mubr.f32.gmra.mrb[0].mxu0 %v730
      %v927 = vpop.f32.mrb[0].mxu0
      %v928 = vadd.f32 0.0, %v927
      %v929 = vpop.f32.mrb[0].mxu0
      %930 = vmatprep.mubr.f32.mxu0 0.0
      %931 = vmatmul.mubr.f32.gmra.mrb[0].mxu0 %v733
      %v932 = vpop.f32.mrb[0].mxu0
      %v933 = vadd.f32 0.0, %v932
      %v934 = vpop.f32.mrb[0].mxu0
      %935 = vmatprep.mubr.f32.mxu0 0.0
      %936 = vmatmul.mubr.f32.gmra.mrb[0].mxu0 %v736
      %v937 = vpop.f32.mrb[0].mxu0
      %v938 = vadd.f32 0.0, %v937
      %v939 = vpop.f32.mrb[0].mxu0
      %940 = vmatprep.mubr.f32.mxu0 0.0
      %941 = vmatmul.mubr.f32.gmra.mrb[0].mxu0 %v739
      %v942 = vpop.f32.mrb[0].mxu0
      %v943 = vadd.f32 0.0, %v942
      %v944 = vpop.f32.mrb[0].mxu0
      %945 = vmatprep.mubr.f32.mxu0 0.0
      %946 = vmatmul.mubr.f32.gmra.mrb[0].mxu0 %v742
      %v947 = vpop.f32.mrb[0].mxu0
      %v948 = vadd.f32 0.0, %v947
      %v949 = vpop.f32.mrb[0].mxu0
      %950 = vmatprep.mubr.f32.mxu0 0.0
      %951 = vmatmul.mubr.f32.gmra.mrb[0].mxu0 %v745
      %v952 = vpop.f32.mrb[0].mxu0
      %v953 = vadd.f32 0.0, %v952
      %v954 = vpop.f32.mrb[0].mxu0
      %955 = vmatprep.mubr.f32.mxu0 0.0
      %956 = vmatmul.mubr.f32.gmra.mrb[0].mxu0 %v748
      %v957 = vpop.f32.mrb[0].mxu0
      %v958 = vadd.f32 0.0, %v957
      %v959 = vpop.f32.mrb[0].mxu0
      %960 = vmatprep.mubr.f32.mxu0 0.0
      %961 = vmatmul.mubr.f32.gmra.mrb[0].mxu0 %v751
      %v962 = vpop.f32.mrb[0].mxu0
      %v963 = vadd.f32 0.0, %v962
      %v964 = vpop.f32.mrb[0].mxu0
      %965 = vmatprep.mubr.f32.mxu0 0.0
      %966 = vmatmul.mubr.f32.gmra.mrb[0].mxu0 %v754
      %v967 = vpop.f32.mrb[0].mxu0
      %v968 = vadd.f32 0.0, %v967
      %v969 = vpop.f32.mrb[0].mxu0
      %970 = vmatprep.mubr.f32.mxu0 0.0
      %971 = vmatmul.mubr.f32.gmra.mrb[0].mxu0 %v757
      %v972 = vpop.f32.mrb[0].mxu0
      %v973 = vadd.f32 0.0, %v972
      %v974 = vpop.f32.mrb[0].mxu0
      %975 = vmatprep.mubr.f32.mxu0 0.0
      %976 = vmatmul.mubr.f32.gmra.mrb[0].mxu0 %v760
      %v977 = vpop.f32.mrb[0].mxu0
      %v978 = vadd.f32 0.0, %v977
      %v979 = vpop.f32.mrb[0].mxu0
      %980 = vmatprep.mubr.f32.mxu0 0.0
      %981 = vmatmul.mubr.f32.gmra.mrb[0].mxu0 %v763
      %v982 = vpop.f32.mrb[0].mxu0
      %v983 = vadd.f32 0.0, %v982
      %v984 = vpop.f32.mrb[0].mxu0
      %985 = vmatprep.mubr.f32.mxu0 0.0
      %986 = vmatmul.mubr.f32.gmra.mrb[0].mxu0 %v766
      %v987 = vpop.f32.mrb[0].mxu0
      %v988 = vadd.f32 0.0, %v987
      %v989 = vpop.f32.mrb[0].mxu0
      %990 = vmatprep.mubr.f32.mxu0 0.0
      %991 = vmatmul.mubr.f32.gmra.mrb[0].mxu0 %v769
      %v992 = vpop.f32.mrb[0].mxu0
      %v993 = vadd.f32 0.0, %v992
      %v994 = vpop.f32.mrb[0].mxu0
      %995 = vdwg.mxu0
      %v996 = vlaneseq
      %v997 = vshrl.u32 %v996, 7
      %v998 = vsub.s32 0, %v997
      %v999 = vrot.slane %v188, %v998
      %v1000 = vmul.f32 %v838, %v999
      %v1001 = vmul.f32 %v843, %v999
      %v1002 = vmul.f32 %v848, %v999
      %v1003 = vmul.f32 %v853, %v999
      %v1004 = vmul.f32 %v858, %v999
      %v1005 = vmul.f32 %v863, %v999
      %v1006 = vmul.f32 %v868, %v999
      %v1007 = vmul.f32 %v873, %v999
      %v1008 = vmul.f32 %v878, %v999
      %v1009 = vmul.f32 %v883, %v999
      %v1010 = vmul.f32 %v888, %v999
      %v1011 = vmul.f32 %v893, %v999
      %v1012 = vmul.f32 %v898, %v999
      %v1013 = vmul.f32 %v903, %v999
      %v1014 = vmul.f32 %v908, %v999
      %v1015 = vmul.f32 %v913, %v999
      %v1016 = vmul.f32 %v918, %v999
      %v1017 = vmul.f32 %v923, %v999
      %v1018 = vmul.f32 %v928, %v999
      %v1019 = vmul.f32 %v933, %v999
      %v1020 = vmul.f32 %v938, %v999
      %v1021 = vmul.f32 %v943, %v999
      %v1022 = vmul.f32 %v948, %v999
      %v1023 = vmul.f32 %v953, %v999
      %v1024 = vmul.f32 %v958, %v999
      %v1025 = vmul.f32 %v963, %v999
      %v1026 = vmul.f32 %v968, %v999
      %v1027 = vmul.f32 %v973, %v999
      %v1028 = vmul.f32 %v978, %v999
      %v1029 = vmul.f32 %v983, %v999
      %v1030 = vmul.f32 %v988, %v999
      %v1031 = vmul.f32 %v993, %v999
      %v1032 = vlaneseq
      %v1033 = vshrl.u32 %v1032, 7
      %v1034 = vsub.s32 1, %v1033
      %v1035 = vrot.slane %v188, %v1034
      %v1036 = vadd.f32 %v1000, %v1035
      %v1037 = vadd.f32 %v1001, %v1035
      %v1038 = vadd.f32 %v1002, %v1035
      %v1039 = vadd.f32 %v1003, %v1035
      %v1040 = vadd.f32 %v1004, %v1035
      %v1041 = vadd.f32 %v1005, %v1035
      %v1042 = vadd.f32 %v1006, %v1035
      %v1043 = vadd.f32 %v1007, %v1035
      %v1044 = vadd.f32 %v1008, %v1035
      %v1045 = vadd.f32 %v1009, %v1035
      %v1046 = vadd.f32 %v1010, %v1035
      %v1047 = vadd.f32 %v1011, %v1035
      %v1048 = vadd.f32 %v1012, %v1035
      %v1049 = vadd.f32 %v1013, %v1035
      %v1050 = vadd.f32 %v1014, %v1035
      %v1051 = vadd.f32 %v1015, %v1035
      %v1052 = vadd.f32 %v1016, %v1035
      %v1053 = vadd.f32 %v1017, %v1035
      %v1054 = vadd.f32 %v1018, %v1035
      %v1055 = vadd.f32 %v1019, %v1035
      %v1056 = vadd.f32 %v1020, %v1035
      %v1057 = vadd.f32 %v1021, %v1035
      %v1058 = vadd.f32 %v1022, %v1035
      %v1059 = vadd.f32 %v1023, %v1035
      %v1060 = vadd.f32 %v1024, %v1035
      %v1061 = vadd.f32 %v1025, %v1035
      %v1062 = vadd.f32 %v1026, %v1035
      %v1063 = vadd.f32 %v1027, %v1035
      %v1064 = vadd.f32 %v1028, %v1035
      %v1065 = vadd.f32 %v1029, %v1035
      %v1066 = vadd.f32 %v1030, %v1035
      %v1067 = vadd.f32 %v1031, %v1035
      %vm1068 = vcmp.ge.f32.partialorder %v1036, 0.0
      %vm1069 = vcmp.ge.f32.partialorder %v1037, 0.0
      %vm1070 = vcmp.ge.f32.partialorder %v1038, 0.0
      %vm1071 = vcmp.ge.f32.partialorder %v1039, 0.0
      %vm1072 = vcmp.ge.f32.partialorder %v1040, 0.0
      %vm1073 = vcmp.ge.f32.partialorder %v1041, 0.0
      %vm1074 = vcmp.ge.f32.partialorder %v1042, 0.0
      %vm1075 = vcmp.ge.f32.partialorder %v1043, 0.0
      %vm1076 = vcmp.ge.f32.partialorder %v1044, 0.0
      %vm1077 = vcmp.ge.f32.partialorder %v1045, 0.0
      %vm1078 = vcmp.ge.f32.partialorder %v1046, 0.0
      %vm1079 = vcmp.ge.f32.partialorder %v1047, 0.0
      %vm1080 = vcmp.ge.f32.partialorder %v1048, 0.0
      %vm1081 = vcmp.ge.f32.partialorder %v1049, 0.0
      %vm1082 = vcmp.ge.f32.partialorder %v1050, 0.0
      %vm1083 = vcmp.ge.f32.partialorder %v1051, 0.0
      %vm1084 = vcmp.ge.f32.partialorder %v1052, 0.0
      %vm1085 = vcmp.ge.f32.partialorder %v1053, 0.0
      %vm1086 = vcmp.ge.f32.partialorder %v1054, 0.0
      %vm1087 = vcmp.ge.f32.partialorder %v1055, 0.0
      %vm1088 = vcmp.ge.f32.partialorder %v1056, 0.0
      %vm1089 = vcmp.ge.f32.partialorder %v1057, 0.0
      %vm1090 = vcmp.ge.f32.partialorder %v1058, 0.0
      %vm1091 = vcmp.ge.f32.partialorder %v1059, 0.0
      %vm1092 = vcmp.ge.f32.partialorder %v1060, 0.0
      %vm1093 = vcmp.ge.f32.partialorder %v1061, 0.0
      %vm1094 = vcmp.ge.f32.partialorder %v1062, 0.0
      %vm1095 = vcmp.ge.f32.partialorder %v1063, 0.0
      %vm1096 = vcmp.ge.f32.partialorder %v1064, 0.0
      %vm1097 = vcmp.ge.f32.partialorder %v1065, 0.0
      %vm1098 = vcmp.ge.f32.partialorder %v1066, 0.0
      %vm1099 = vcmp.ge.f32.partialorder %v1067, 0.0
      %v1100 = vmul.f32 %v1036, 0.01
      %v1101 = vmul.f32 %v1037, 0.01
      %v1102 = vmul.f32 %v1038, 0.01
      %v1103 = vmul.f32 %v1039, 0.01
      %v1104 = vmul.f32 %v1040, 0.01
      %v1105 = vmul.f32 %v1041, 0.01
      %v1106 = vmul.f32 %v1042, 0.01
      %v1107 = vmul.f32 %v1043, 0.01
      %v1108 = vmul.f32 %v1044, 0.01
      %v1109 = vmul.f32 %v1045, 0.01
      %v1110 = vmul.f32 %v1046, 0.01
      %v1111 = vmul.f32 %v1047, 0.01
      %v1112 = vmul.f32 %v1048, 0.01
      %v1113 = vmul.f32 %v1049, 0.01
      %v1114 = vmul.f32 %v1050, 0.01
      %v1115 = vmul.f32 %v1051, 0.01
      %v1116 = vmul.f32 %v1052, 0.01
      %v1117 = vmul.f32 %v1053, 0.01
      %v1118 = vmul.f32 %v1054, 0.01
      %v1119 = vmul.f32 %v1055, 0.01
      %v1120 = vmul.f32 %v1056, 0.01
      %v1121 = vmul.f32 %v1057, 0.01
      %v1122 = vmul.f32 %v1058, 0.01
      %v1123 = vmul.f32 %v1059, 0.01
      %v1124 = vmul.f32 %v1060, 0.01
      %v1125 = vmul.f32 %v1061, 0.01
      %v1126 = vmul.f32 %v1062, 0.01
      %v1127 = vmul.f32 %v1063, 0.01
      %v1128 = vmul.f32 %v1064, 0.01
      %v1129 = vmul.f32 %v1065, 0.01
      %v1130 = vmul.f32 %v1066, 0.01
      %v1131 = vmul.f32 %v1067, 0.01
      %v1132 = vsel %vm1068, %v1036, %v1100
      %v1133 = vsel %vm1069, %v1037, %v1101
      %v1134 = vsel %vm1070, %v1038, %v1102
      %v1135 = vsel %vm1071, %v1039, %v1103
      %v1136 = vsel %vm1072, %v1040, %v1104
      %v1137 = vsel %vm1073, %v1041, %v1105
      %v1138 = vsel %vm1074, %v1042, %v1106
      %v1139 = vsel %vm1075, %v1043, %v1107
      %v1140 = vsel %vm1076, %v1044, %v1108
      %v1141 = vsel %vm1077, %v1045, %v1109
      %v1142 = vsel %vm1078, %v1046, %v1110
      %v1143 = vsel %vm1079, %v1047, %v1111
      %v1144 = vsel %vm1080, %v1048, %v1112
      %v1145 = vsel %vm1081, %v1049, %v1113
      %v1146 = vsel %vm1082, %v1050, %v1114
      %v1147 = vsel %vm1083, %v1051, %v1115
      %v1148 = vsel %vm1084, %v1052, %v1116
      %v1149 = vsel %vm1085, %v1053, %v1117
      %v1150 = vsel %vm1086, %v1054, %v1118
      %v1151 = vsel %vm1087, %v1055, %v1119
      %v1152 = vsel %vm1088, %v1056, %v1120
      %v1153 = vsel %vm1089, %v1057, %v1121
      %v1154 = vsel %vm1090, %v1058, %v1122
      %v1155 = vsel %vm1091, %v1059, %v1123
      %v1156 = vsel %vm1092, %v1060, %v1124
      %v1157 = vsel %vm1093, %v1061, %v1125
      %v1158 = vsel %vm1094, %v1062, %v1126
      %v1159 = vsel %vm1095, %v1063, %v1127
      %v1160 = vsel %vm1096, %v1064, %v1128
      %v1161 = vsel %vm1097, %v1065, %v1129
      %v1162 = vsel %vm1098, %v1066, %v1130
      %v1163 = vsel %vm1099, %v1067, %v1131
      %1164 = vst.msk [vmem:[#allocation2] sm:$0xff] %vm608, %v1132
      %1165 = vst.msk [vmem:[#allocation2 + $0x8] sm:$0xff] %vm608, %v1133
      %1166 = vst.msk [vmem:[#allocation2 + $0x10] sm:$0xff] %vm608, %v1134
      %1167 = vst.msk [vmem:[#allocation2 + $0x18] sm:$0xff] %vm608, %v1135
      %1168 = vst.msk [vmem:[#allocation2 + $0x20] sm:$0xff] %vm608, %v1136
      %1169 = vst.msk [vmem:[#allocation2 + $0x28] sm:$0xff] %vm608, %v1137
      %1170 = vst.msk [vmem:[#allocation2 + $0x30] sm:$0xff] %vm608, %v1138
      %1171 = vst.msk [vmem:[#allocation2 + $0x38] sm:$0xff] %vm608, %v1139
      %1172 = vst.msk [vmem:[#allocation2 + $0x40] sm:$0xff] %vm608, %v1140
      %1173 = vst.msk [vmem:[#allocation2 + $0x48] sm:$0xff] %vm608, %v1141
      %1174 = vst.msk [vmem:[#allocation2 + $0x50] sm:$0xff] %vm608, %v1142
      %1175 = vst.msk [vmem:[#allocation2 + $0x58] sm:$0xff] %vm608, %v1143
      %1176 = vst.msk [vmem:[#allocation2 + $0x60] sm:$0xff] %vm608, %v1144
      %1177 = vst.msk [vmem:[#allocation2 + $0x68] sm:$0xff] %vm608, %v1145
      %1178 = vst.msk [vmem:[#allocation2 + $0x70] sm:$0xff] %vm608, %v1146
      %1179 = vst.msk [vmem:[#allocation2 + $0x78] sm:$0xff] %vm608, %v1147
      %1180 = vst.msk [vmem:[#allocation2 + $0x80] sm:$0xff] %vm608, %v1148
      %1181 = vst.msk [vmem:[#allocation2 + $0x88] sm:$0xff] %vm608, %v1149
      %1182 = vst.msk [vmem:[#allocation2 + $0x90] sm:$0xff] %vm608, %v1150
      %1183 = vst.msk [vmem:[#allocation2 + $0x98] sm:$0xff] %vm608, %v1151
      %1184 = vst.msk [vmem:[#allocation2 + $0xa0] sm:$0xff] %vm608, %v1152
      %1185 = vst.msk [vmem:[#allocation2 + $0xa8] sm:$0xff] %vm608, %v1153
      %1186 = vst.msk [vmem:[#allocation2 + $0xb0] sm:$0xff] %vm608, %v1154
      %1187 = vst.msk [vmem:[#allocation2 + $0xb8] sm:$0xff] %vm608, %v1155
      %1188 = vst.msk [vmem:[#allocation2 + $0xc0] sm:$0xff] %vm608, %v1156
      %1189 = vst.msk [vmem:[#allocation2 + $0xc8] sm:$0xff] %vm608, %v1157
      %1190 = vst.msk [vmem:[#allocation2 + $0xd0] sm:$0xff] %vm608, %v1158
      %1191 = vst.msk [vmem:[#allocation2 + $0xd8] sm:$0xff] %vm608, %v1159
      %1192 = vst.msk [vmem:[#allocation2 + $0xe0] sm:$0xff] %vm608, %v1160
      %1193 = vst.msk [vmem:[#allocation2 + $0xe8] sm:$0xff] %vm608, %v1161
      %1194 = vst.msk [vmem:[#allocation2 + $0xf0] sm:$0xff] %vm608, %v1162
      %1195 = vst.msk [vmem:[#allocation2 + $0xf8] sm:$0xff] %vm608, %v1163
      %v1196 = vld [vmem:[#allocation2] ss:$2 sm:$0xff]
      %s1197 = scalar_lea.vmem [#allocation2], 16
      %v1198 = vld [vmem:[%s1197] ss:$2 sm:$0xff]
      %s1199 = scalar_lea.vmem [#allocation2], 32
      %v1200 = vld [vmem:[%s1199] ss:$2 sm:$0xff]
      %s1201 = scalar_lea.vmem [#allocation2], 48
      %v1202 = vld [vmem:[%s1201] ss:$2 sm:$0xff]
      %s1203 = scalar_lea.vmem [#allocation2], 64
      %v1204 = vld [vmem:[%s1203] ss:$2 sm:$0xff]
      %s1205 = scalar_lea.vmem [#allocation2], 80
      %v1206 = vld [vmem:[%s1205] ss:$2 sm:$0xff]
      %s1207 = scalar_lea.vmem [#allocation2], 96
      %v1208 = vld [vmem:[%s1207] ss:$2 sm:$0xff]
      %s1209 = scalar_lea.vmem [#allocation2], 112
      %v1210 = vld [vmem:[%s1209] ss:$2 sm:$0xff]
      %s1211 = scalar_lea.vmem [#allocation2], 128
      %v1212 = vld [vmem:[%s1211] ss:$2 sm:$0xff]
      %s1213 = scalar_lea.vmem [#allocation2], 144
      %v1214 = vld [vmem:[%s1213] ss:$2 sm:$0xff]
      %s1215 = scalar_lea.vmem [#allocation2], 160
      %v1216 = vld [vmem:[%s1215] ss:$2 sm:$0xff]
      %s1217 = scalar_lea.vmem [#allocation2], 176
      %v1218 = vld [vmem:[%s1217] ss:$2 sm:$0xff]
      %s1219 = scalar_lea.vmem [#allocation2], 192
      %v1220 = vld [vmem:[%s1219] ss:$2 sm:$0xff]
      %s1221 = scalar_lea.vmem [#allocation2], 208
      %v1222 = vld [vmem:[%s1221] ss:$2 sm:$0xff]
      %s1223 = scalar_lea.vmem [#allocation2], 224
      %v1224 = vld [vmem:[%s1223] ss:$2 sm:$0xff]
      %s1225 = scalar_lea.vmem [#allocation2], 240
      %v1226 = vld [vmem:[%s1225] ss:$2 sm:$0xff]
      %s1227 = scalar_lea.vmem [#allocation2], 1
      %v1228 = vld [vmem:[%s1227] ss:$2 sm:$0xff]
      %s1229 = scalar_lea.vmem [#allocation2], 17
      %v1230 = vld [vmem:[%s1229] ss:$2 sm:$0xff]
      %s1231 = scalar_lea.vmem [#allocation2], 33
      %v1232 = vld [vmem:[%s1231] ss:$2 sm:$0xff]
      %s1233 = scalar_lea.vmem [#allocation2], 49
      %v1234 = vld [vmem:[%s1233] ss:$2 sm:$0xff]
      %s1235 = scalar_lea.vmem [#allocation2], 65
      %v1236 = vld [vmem:[%s1235] ss:$2 sm:$0xff]
      %s1237 = scalar_lea.vmem [#allocation2], 81
      %v1238 = vld [vmem:[%s1237] ss:$2 sm:$0xff]
      %s1239 = scalar_lea.vmem [#allocation2], 97
      %v1240 = vld [vmem:[%s1239] ss:$2 sm:$0xff]
      %s1241 = scalar_lea.vmem [#allocation2], 113
      %v1242 = vld [vmem:[%s1241] ss:$2 sm:$0xff]
      %s1243 = scalar_lea.vmem [#allocation2], 129
      %v1244 = vld [vmem:[%s1243] ss:$2 sm:$0xff]
      %s1245 = scalar_lea.vmem [#allocation2], 145
      %v1246 = vld [vmem:[%s1245] ss:$2 sm:$0xff]
      %s1247 = scalar_lea.vmem [#allocation2], 161
      %v1248 = vld [vmem:[%s1247] ss:$2 sm:$0xff]
      %s1249 = scalar_lea.vmem [#allocation2], 177
      %v1250 = vld [vmem:[%s1249] ss:$2 sm:$0xff]
      %s1251 = scalar_lea.vmem [#allocation2], 193
      %v1252 = vld [vmem:[%s1251] ss:$2 sm:$0xff]
      %s1253 = scalar_lea.vmem [#allocation2], 209
      %v1254 = vld [vmem:[%s1253] ss:$2 sm:$0xff]
      %s1255 = scalar_lea.vmem [#allocation2], 225
      %v1256 = vld [vmem:[%s1255] ss:$2 sm:$0xff]
      %s1257 = scalar_lea.vmem [#allocation2], 241
      %v1258 = vld [vmem:[%s1257] ss:$2 sm:$0xff]
      %v1259 = vmax.f32 %v1196, %v1228
      %v1260 = vmax.f32 %v1198, %v1230
      %v1261 = vmax.f32 %v1200, %v1232
      %v1262 = vmax.f32 %v1202, %v1234
      %v1263 = vmax.f32 %v1204, %v1236
      %v1264 = vmax.f32 %v1206, %v1238
      %v1265 = vmax.f32 %v1208, %v1240
      %v1266 = vmax.f32 %v1210, %v1242
      %v1267 = vmax.f32 %v1212, %v1244
      %v1268 = vmax.f32 %v1214, %v1246
      %v1269 = vmax.f32 %v1216, %v1248
      %v1270 = vmax.f32 %v1218, %v1250
      %v1271 = vmax.f32 %v1220, %v1252
      %v1272 = vmax.f32 %v1222, %v1254
      %v1273 = vmax.f32 %v1224, %v1256
      %v1274 = vmax.f32 %v1226, %v1258
      %vm1275 = vcmask 57344
      %1276 = vst.msk [vmem:[#allocation3] sm:$0x1] %vm1275, 0.0
      %1277 = vst.msk [vmem:[#allocation3 + $0x18] sm:$0x1] %vm1275, 0.0
      %1278 = vst.msk [vmem:[#allocation3 + $0x30] sm:$0x1] %vm1275, 0.0
      %1279 = vst.msk [vmem:[#allocation3 + $0x48] sm:$0x1] %vm1275, 0.0
      %1280 = vst.msk [vmem:[#allocation3 + $0x60] sm:$0x1] %vm1275, 0.0
      %1281 = vst.msk [vmem:[#allocation3 + $0x78] sm:$0x1] %vm1275, 0.0
      %1282 = vst.msk [vmem:[#allocation3 + $0x90] sm:$0x1] %vm1275, 0.0
      %1283 = vst.msk [vmem:[#allocation3 + $0xa8] sm:$0x1] %vm1275, 0.0
      %1284 = vst.msk [vmem:[#allocation3 + $0x11] sm:$0x1] %vm1275, 0.0
      %1285 = vst.msk [vmem:[#allocation3 + $0x29] sm:$0x1] %vm1275, 0.0
      %1286 = vst.msk [vmem:[#allocation3 + $0x41] sm:$0x1] %vm1275, 0.0
      %1287 = vst.msk [vmem:[#allocation3 + $0x59] sm:$0x1] %vm1275, 0.0
      %1288 = vst.msk [vmem:[#allocation3 + $0x71] sm:$0x1] %vm1275, 0.0
      %1289 = vst.msk [vmem:[#allocation3 + $0x89] sm:$0x1] %vm1275, 0.0
      %1290 = vst.msk [vmem:[#allocation3 + $0xa1] sm:$0x1] %vm1275, 0.0
      %1291 = vst.msk [vmem:[#allocation3 + $0xb9] sm:$0x1] %vm1275, 0.0
      %1292 = vst.msk [vmem:[#allocation3 + $0x1] sm:$0xff] %vm608, %v1259
      %1293 = vst.msk [vmem:[#allocation3 + $0x9] sm:$0xff] %vm608, %v1260
      %1294 = vst.msk [vmem:[#allocation3 + $0x19] sm:$0xff] %vm608, %v1261
      %1295 = vst.msk [vmem:[#allocation3 + $0x21] sm:$0xff] %vm608, %v1262
      %1296 = vst.msk [vmem:[#allocation3 + $0x31] sm:$0xff] %vm608, %v1263
      %1297 = vst.msk [vmem:[#allocation3 + $0x39] sm:$0xff] %vm608, %v1264
      %1298 = vst.msk [vmem:[#allocation3 + $0x49] sm:$0xff] %vm608, %v1265
      %1299 = vst.msk [vmem:[#allocation3 + $0x51] sm:$0xff] %vm608, %v1266
      %1300 = vst.msk [vmem:[#allocation3 + $0x61] sm:$0xff] %vm608, %v1267
      %1301 = vst.msk [vmem:[#allocation3 + $0x69] sm:$0xff] %vm608, %v1268
      %1302 = vst.msk [vmem:[#allocation3 + $0x79] sm:$0xff] %vm608, %v1269
      %1303 = vst.msk [vmem:[#allocation3 + $0x81] sm:$0xff] %vm608, %v1270
      %1304 = vst.msk [vmem:[#allocation3 + $0x91] sm:$0xff] %vm608, %v1271
      %1305 = vst.msk [vmem:[#allocation3 + $0x99] sm:$0xff] %vm608, %v1272
      %1306 = vst.msk [vmem:[#allocation3 + $0xa9] sm:$0xff] %vm608, %v1273
      %1307 = vst.msk [vmem:[#allocation3 + $0xb1] sm:$0xff] %vm608, %v1274
      %v1308 = vld [vmem:[#allocation3] sm:$0xff]
      %v1309 = vld [vmem:[#allocation3 + $0x8] sm:$0xff]
      %v1310 = vld [vmem:[#allocation3 + $0x18] sm:$0xff]
      %v1311 = vld [vmem:[#allocation3 + $0x20] sm:$0xff]
      %v1312 = vld [vmem:[#allocation3 + $0x30] sm:$0xff]
      %v1313 = vld [vmem:[#allocation3 + $0x38] sm:$0xff]
      %v1314 = vld [vmem:[#allocation3 + $0x48] sm:$0xff]
      %v1315 = vld [vmem:[#allocation3 + $0x50] sm:$0xff]
      %v1316 = vld [vmem:[#allocation3 + $0x60] sm:$0xff]
      %v1317 = vld [vmem:[#allocation3 + $0x68] sm:$0xff]
      %v1318 = vld [vmem:[#allocation3 + $0x78] sm:$0xff]
      %v1319 = vld [vmem:[#allocation3 + $0x80] sm:$0xff]
      %v1320 = vld [vmem:[#allocation3 + $0x90] sm:$0xff]
      %v1321 = vld [vmem:[#allocation3 + $0x98] sm:$0xff]
      %v1322 = vld [vmem:[#allocation3 + $0xa8] sm:$0xff]
      %v1323 = vld [vmem:[#allocation3 + $0xb0] sm:$0xff]
      %v1324 = vld [vmem:[#allocation3 + $0x1] sm:$0xff]
      %v1325 = vld [vmem:[#allocation3 + $0x9] sm:$0xff]
      %v1326 = vld [vmem:[#allocation3 + $0x19] sm:$0xff]
      %v1327 = vld [vmem:[#allocation3 + $0x21] sm:$0xff]
      %v1328 = vld [vmem:[#allocation3 + $0x31] sm:$0xff]
      %v1329 = vld [vmem:[#allocation3 + $0x39] sm:$0xff]
      %v1330 = vld [vmem:[#allocation3 + $0x49] sm:$0xff]
      %v1331 = vld [vmem:[#allocation3 + $0x51] sm:$0xff]
      %v1332 = vld [vmem:[#allocation3 + $0x61] sm:$0xff]
      %v1333 = vld [vmem:[#allocation3 + $0x69] sm:$0xff]
      %v1334 = vld [vmem:[#allocation3 + $0x79] sm:$0xff]
      %v1335 = vld [vmem:[#allocation3 + $0x81] sm:$0xff]
      %v1336 = vld [vmem:[#allocation3 + $0x91] sm:$0xff]
      %v1337 = vld [vmem:[#allocation3 + $0x99] sm:$0xff]
      %v1338 = vld [vmem:[#allocation3 + $0xa9] sm:$0xff]
      %v1339 = vld [vmem:[#allocation3 + $0xb1] sm:$0xff]
      %v1340 = vld [vmem:[#allocation3 + $0x2] sm:$0xff]
      %v1341 = vld [vmem:[#allocation3 + $0xa] sm:$0xff]
      %v1342 = vld [vmem:[#allocation3 + $0x1a] sm:$0xff]
      %v1343 = vld [vmem:[#allocation3 + $0x22] sm:$0xff]
      %v1344 = vld [vmem:[#allocation3 + $0x32] sm:$0xff]
      %v1345 = vld [vmem:[#allocation3 + $0x3a] sm:$0xff]
      %v1346 = vld [vmem:[#allocation3 + $0x4a] sm:$0xff]
      %v1347 = vld [vmem:[#allocation3 + $0x52] sm:$0xff]
      %v1348 = vld [vmem:[#allocation3 + $0x62] sm:$0xff]
      %v1349 = vld [vmem:[#allocation3 + $0x6a] sm:$0xff]
      %v1350 = vld [vmem:[#allocation3 + $0x7a] sm:$0xff]
      %v1351 = vld [vmem:[#allocation3 + $0x82] sm:$0xff]
      %v1352 = vld [vmem:[#allocation3 + $0x92] sm:$0xff]
      %v1353 = vld [vmem:[#allocation3 + $0x9a] sm:$0xff]
      %v1354 = vld [vmem:[#allocation3 + $0xaa] sm:$0xff]
      %v1355 = vld [vmem:[#allocation3 + $0xb2] sm:$0xff]
      %1372 = vrot.lane.b32.xlu0 %v1324, 8
      %v1373 = vpop.permute.xlu0 %1372
      %1374 = vrot.lane.b32.xlu0 %v1325, 8
      %v1375 = vpop.permute.xlu0 %1374
      %1376 = vrot.lane.b32.xlu0 %v1326, 8
      %v1377 = vpop.permute.xlu0 %1376
      %1378 = vrot.lane.b32.xlu0 %v1327, 8
      %v1379 = vpop.permute.xlu0 %1378
      %1380 = vrot.lane.b32.xlu0 %v1328, 8
      %v1381 = vpop.permute.xlu0 %1380
      %1382 = vrot.lane.b32.xlu0 %v1329, 8
      %v1383 = vpop.permute.xlu0 %1382
      %1384 = vrot.lane.b32.xlu0 %v1330, 8
      %v1385 = vpop.permute.xlu0 %1384
      %1386 = vrot.lane.b32.xlu0 %v1331, 8
      %v1387 = vpop.permute.xlu0 %1386
      %1388 = vrot.lane.b32.xlu0 %v1332, 8
      %v1389 = vpop.permute.xlu0 %1388
      %1390 = vrot.lane.b32.xlu0 %v1333, 8
      %v1391 = vpop.permute.xlu0 %1390
      %1392 = vrot.lane.b32.xlu0 %v1334, 8
      %v1393 = vpop.permute.xlu0 %1392
      %1394 = vrot.lane.b32.xlu0 %v1335, 8
      %v1395 = vpop.permute.xlu0 %1394
      %1396 = vrot.lane.b32.xlu0 %v1336, 8
      %v1397 = vpop.permute.xlu0 %1396
      %1398 = vrot.lane.b32.xlu0 %v1337, 8
      %v1399 = vpop.permute.xlu0 %1398
      %1400 = vrot.lane.b32.xlu0 %v1338, 8
      %v1401 = vpop.permute.xlu0 %1400
      %1402 = vrot.lane.b32.xlu0 %v1339, 8
      %v1403 = vpop.permute.xlu0 %1402
      %1436 = vrot.lane.b32.xlu0 %v1340, 16
      %v1437 = vpop.permute.xlu0 %1436
      %1438 = vrot.lane.b32.xlu0 %v1341, 16
      %v1439 = vpop.permute.xlu0 %1438
      %1440 = vrot.lane.b32.xlu0 %v1342, 16
      %v1441 = vpop.permute.xlu0 %1440
      %1442 = vrot.lane.b32.xlu0 %v1343, 16
      %v1443 = vpop.permute.xlu0 %1442
      %1444 = vrot.lane.b32.xlu0 %v1344, 16
      %v1445 = vpop.permute.xlu0 %1444
      %1446 = vrot.lane.b32.xlu0 %v1345, 16
      %v1447 = vpop.permute.xlu0 %1446
      %1448 = vrot.lane.b32.xlu0 %v1346, 16
      %v1449 = vpop.permute.xlu0 %1448
      %1450 = vrot.lane.b32.xlu0 %v1347, 16
      %v1451 = vpop.permute.xlu0 %1450
      %1452 = vrot.lane.b32.xlu0 %v1348, 16
      %v1453 = vpop.permute.xlu0 %1452
      %1454 = vrot.lane.b32.xlu0 %v1349, 16
      %v1455 = vpop.permute.xlu0 %1454
      %1456 = vrot.lane.b32.xlu0 %v1350, 16
      %v1457 = vpop.permute.xlu0 %1456
      %1458 = vrot.lane.b32.xlu0 %v1351, 16
      %v1459 = vpop.permute.xlu0 %1458
      %1460 = vrot.lane.b32.xlu0 %v1352, 16
      %v1461 = vpop.permute.xlu0 %1460
      %1462 = vrot.lane.b32.xlu0 %v1353, 16
      %v1463 = vpop.permute.xlu0 %1462
      %1464 = vrot.lane.b32.xlu0 %v1354, 16
      %v1465 = vpop.permute.xlu0 %1464
      %1466 = vrot.lane.b32.xlu0 %v1355, 16
      %v1467 = vpop.permute.xlu0 %1466
      %v1484 = vsel %vm608, %v1308, %v1373
      %v1485 = vsel %vm608, %v1309, %v1375
      %v1486 = vsel %vm608, %v1310, %v1377
      %v1487 = vsel %vm608, %v1311, %v1379
      %v1488 = vsel %vm608, %v1312, %v1381
      %v1489 = vsel %vm608, %v1313, %v1383
      %v1490 = vsel %vm608, %v1314, %v1385
      %v1491 = vsel %vm608, %v1315, %v1387
      %v1492 = vsel %vm608, %v1316, %v1389
      %v1493 = vsel %vm608, %v1317, %v1391
      %v1494 = vsel %vm608, %v1318, %v1393
      %v1495 = vsel %vm608, %v1319, %v1395
      %v1496 = vsel %vm608, %v1320, %v1397
      %v1497 = vsel %vm608, %v1321, %v1399
      %v1498 = vsel %vm608, %v1322, %v1401
      %v1499 = vsel %vm608, %v1323, %v1403
      %v1500 = vsel %vm641, %v1484, %v1437
      %v1501 = vsel %vm641, %v1485, %v1439
      %v1502 = vsel %vm641, %v1486, %v1441
      %v1503 = vsel %vm641, %v1487, %v1443
      %v1504 = vsel %vm641, %v1488, %v1445
      %v1505 = vsel %vm641, %v1489, %v1447
      %v1506 = vsel %vm641, %v1490, %v1449
      %v1507 = vsel %vm641, %v1491, %v1451
      %v1508 = vsel %vm641, %v1492, %v1453
      %v1509 = vsel %vm641, %v1493, %v1455
      %v1510 = vsel %vm641, %v1494, %v1457
      %v1511 = vsel %vm641, %v1495, %v1459
      %v1512 = vsel %vm641, %v1496, %v1461
      %v1513 = vsel %vm641, %v1497, %v1463
      %v1514 = vsel %vm641, %v1498, %v1465
      %v1515 = vsel %vm641, %v1499, %v1467
      %v1517 = vsel %vm674, %v1500, 0
      %v1520 = vsel %vm674, %v1501, 0
      %v1523 = vsel %vm674, %v1502, 0
      %v1526 = vsel %vm674, %v1503, 0
      %v1529 = vsel %vm674, %v1504, 0
      %v1532 = vsel %vm674, %v1505, 0
      %v1535 = vsel %vm674, %v1506, 0
      %v1538 = vsel %vm674, %v1507, 0
      %v1541 = vsel %vm674, %v1508, 0
      %v1544 = vsel %vm674, %v1509, 0
      %v1547 = vsel %vm674, %v1510, 0
      %v1550 = vsel %vm674, %v1511, 0
      %v1553 = vsel %vm674, %v1512, 0
      %v1556 = vsel %vm674, %v1513, 0
      %v1559 = vsel %vm674, %v1514, 0
      %v1562 = vsel %vm674, %v1515, 0
      %1564 = vmatprep.subr.mxu0 0.0
      %1565 = vmatpush1.msra.mxu0 %v177
      %1566 = vmatprep.subr.mxu0 0.0
      %1567 = vmatpush1.msra.mxu0 %v178
      %1568 = vmatprep.subr.mxu0 0.0
      %1569 = vmatpush1.msra.mxu0 %v179
      %1570 = vmatprep.subr.mxu0 0.0
      %1571 = vmatpush1.msra.mxu0 0.0
      %1572 = vmatprep.subr.mxu0 0.0
      %1573 = vmatpush1.msra.mxu0 0.0
      %1574 = vmatprep.subr.mxu0 0.0
      %1575 = vmatpush1.msra.mxu0 0.0
      %1576 = vmatprep.subr.mxu0 0.0
      %1577 = vmatpush1.msra.mxu0 0.0
      %1578 = vmatprep.subr.mxu0 0.0
      %1579 = vmatpush1.msra.mxu0 0.0
      %1580 = vmatprep.subr.mxu0 0.0
      %1581 = vmatpush1.msra.mxu0 0.0
      %1582 = vmatprep.subr.mxu0 0.0
      %1583 = vmatpush1.msra.mxu0 0.0
      %1584 = vmatprep.subr.mxu0 0.0
      %1585 = vmatpush1.msra.mxu0 0.0
      %1586 = vmatprep.subr.mxu0 0.0
      %1587 = vmatpush1.msra.mxu0 0.0
      %1588 = vmatprep.subr.mxu0 0.0
      %1589 = vmatpush1.msra.mxu0 0.0
      %1590 = vmatprep.subr.mxu0 0.0
      %1591 = vmatpush1.msra.mxu0 0.0
      %1592 = vmatprep.subr.mxu0 0.0
      %1593 = vmatpush1.msra.mxu0 0.0
      %1594 = vmatprep.subr.mxu0 0.0
      %1595 = vmatpush1.msra.mxu0 0.0
      %1596 = vmatprep.subr.mxu0 0.0
      %1597 = vmatpush1.msra.mxu0 0.0
      %1598 = vmatprep.subr.mxu0 0.0
      %1599 = vmatpush1.msra.mxu0 0.0
      %1600 = vmatprep.subr.mxu0 0.0
      %1601 = vmatpush1.msra.mxu0 0.0
      %1602 = vmatprep.subr.mxu0 0.0
      %1603 = vmatpush1.msra.mxu0 0.0
      %1604 = vmatprep.subr.mxu0 0.0
      %1605 = vmatpush1.msra.mxu0 0.0
      %1606 = vmatprep.subr.mxu0 0.0
      %1607 = vmatpush1.msra.mxu0 0.0
      %1608 = vmatprep.subr.mxu0 0.0
      %1609 = vmatpush1.msra.mxu0 0.0
      %1610 = vmatprep.subr.mxu0 0.0
      %1611 = vmatpush1.msra.mxu0 0.0
      %1612 = vmatprep.subr.mxu0 0.0
      %1613 = vmatpush1.msra.mxu0 0.0
      %1614 = vmatprep.subr.mxu0 0.0
      %1615 = vmatpush1.msra.mxu0 0.0
      %1616 = vmatprep.subr.mxu0 0.0
      %1617 = vmatpush1.msra.mxu0 0.0
      %1618 = vmatprep.subr.mxu0 0.0
      %1619 = vmatpush1.msra.mxu0 0.0
      %1620 = vmatprep.subr.mxu0 0.0
      %1621 = vmatpush1.msra.mxu0 0.0
      %1622 = vmatprep.subr.mxu0 0.0
      %1623 = vmatpush1.msra.mxu0 0.0
      %1624 = vmatprep.subr.mxu0 0.0
      %1625 = vmatpush1.msra.mxu0 0.0
      %1626 = vmatprep.subr.mxu0 0.0
      %1627 = vmatpush1.msra.mxu0 0.0
      %1628 = vmatprep.mubr.f32.mxu0 0.0
      %1629 = vmatmul.mubr.f32.gmra.mrb[0].mxu0 %v1517
      %v1630 = vpop.f32.mrb[0].mxu0
      %v1631 = vadd.f32 0.0, %v1630
      %v1632 = vpop.f32.mrb[0].mxu0
      %1633 = vmatprep.mubr.f32.mxu0 0.0
      %1634 = vmatmul.mubr.f32.gmra.mrb[0].mxu0 %v1520
      %v1635 = vpop.f32.mrb[0].mxu0
      %v1636 = vadd.f32 0.0, %v1635
      %v1637 = vpop.f32.mrb[0].mxu0
      %1638 = vmatprep.mubr.f32.mxu0 0.0
      %1639 = vmatmul.mubr.f32.gmra.mrb[0].mxu0 %v1523
      %v1640 = vpop.f32.mrb[0].mxu0
      %v1641 = vadd.f32 0.0, %v1640
      %v1642 = vpop.f32.mrb[0].mxu0
      %1643 = vmatprep.mubr.f32.mxu0 0.0
      %1644 = vmatmul.mubr.f32.gmra.mrb[0].mxu0 %v1526
      %v1645 = vpop.f32.mrb[0].mxu0
      %v1646 = vadd.f32 0.0, %v1645
      %v1647 = vpop.f32.mrb[0].mxu0
      %1648 = vmatprep.mubr.f32.mxu0 0.0
      %1649 = vmatmul.mubr.f32.gmra.mrb[0].mxu0 %v1529
      %v1650 = vpop.f32.mrb[0].mxu0
      %v1651 = vadd.f32 0.0, %v1650
      %v1652 = vpop.f32.mrb[0].mxu0
      %1653 = vmatprep.mubr.f32.mxu0 0.0
      %1654 = vmatmul.mubr.f32.gmra.mrb[0].mxu0 %v1532
      %v1655 = vpop.f32.mrb[0].mxu0
      %v1656 = vadd.f32 0.0, %v1655
      %v1657 = vpop.f32.mrb[0].mxu0
      %1658 = vmatprep.mubr.f32.mxu0 0.0
      %1659 = vmatmul.mubr.f32.gmra.mrb[0].mxu0 %v1535
      %v1660 = vpop.f32.mrb[0].mxu0
      %v1661 = vadd.f32 0.0, %v1660
      %v1662 = vpop.f32.mrb[0].mxu0
      %1663 = vmatprep.mubr.f32.mxu0 0.0
      %1664 = vmatmul.mubr.f32.gmra.mrb[0].mxu0 %v1538
      %v1665 = vpop.f32.mrb[0].mxu0
      %v1666 = vadd.f32 0.0, %v1665
      %v1667 = vpop.f32.mrb[0].mxu0
      %1668 = vmatprep.mubr.f32.mxu0 0.0
      %1669 = vmatmul.mubr.f32.gmra.mrb[0].mxu0 %v1541
      %v1670 = vpop.f32.mrb[0].mxu0
      %v1671 = vadd.f32 0.0, %v1670
      %v1672 = vpop.f32.mrb[0].mxu0
      %1673 = vmatprep.mubr.f32.mxu0 0.0
      %1674 = vmatmul.mubr.f32.gmra.mrb[0].mxu0 %v1544
      %v1675 = vpop.f32.mrb[0].mxu0
      %v1676 = vadd.f32 0.0, %v1675
      %v1677 = vpop.f32.mrb[0].mxu0
      %1678 = vmatprep.mubr.f32.mxu0 0.0
      %1679 = vmatmul.mubr.f32.gmra.mrb[0].mxu0 %v1547
      %v1680 = vpop.f32.mrb[0].mxu0
      %v1681 = vadd.f32 0.0, %v1680
      %v1682 = vpop.f32.mrb[0].mxu0
      %1683 = vmatprep.mubr.f32.mxu0 0.0
      %1684 = vmatmul.mubr.f32.gmra.mrb[0].mxu0 %v1550
      %v1685 = vpop.f32.mrb[0].mxu0
      %v1686 = vadd.f32 0.0, %v1685
      %v1687 = vpop.f32.mrb[0].mxu0
      %1688 = vmatprep.mubr.f32.mxu0 0.0
      %1689 = vmatmul.mubr.f32.gmra.mrb[0].mxu0 %v1553
      %v1690 = vpop.f32.mrb[0].mxu0
      %v1691 = vadd.f32 0.0, %v1690
      %v1692 = vpop.f32.mrb[0].mxu0
      %1693 = vmatprep.mubr.f32.mxu0 0.0
      %1694 = vmatmul.mubr.f32.gmra.mrb[0].mxu0 %v1556
      %v1695 = vpop.f32.mrb[0].mxu0
      %v1696 = vadd.f32 0.0, %v1695
      %v1697 = vpop.f32.mrb[0].mxu0
      %1698 = vmatprep.mubr.f32.mxu0 0.0
      %1699 = vmatmul.mubr.f32.gmra.mrb[0].mxu0 %v1559
      %v1700 = vpop.f32.mrb[0].mxu0
      %v1701 = vadd.f32 0.0, %v1700
      %v1702 = vpop.f32.mrb[0].mxu0
      %1703 = vmatprep.mubr.f32.mxu0 0.0
      %1704 = vmatmul.mubr.f32.gmra.mrb[0].mxu0 %v1562
      %v1705 = vpop.f32.mrb[0].mxu0
      %v1706 = vadd.f32 0.0, %v1705
      %v1707 = vpop.f32.mrb[0].mxu0
      %1708 = vdwg.mxu0
      %v1709 = vlaneseq
      %v1710 = vshrl.u32 %v1709, 7
      %v1711 = vsub.s32 2, %v1710
      %v1712 = vrot.slane %v188, %v1711
      %v1713 = vmul.f32 %v1631, %v1712
      %v1714 = vmul.f32 %v1636, %v1712
      %v1715 = vmul.f32 %v1641, %v1712
      %v1716 = vmul.f32 %v1646, %v1712
      %v1717 = vmul.f32 %v1651, %v1712
      %v1718 = vmul.f32 %v1656, %v1712
      %v1719 = vmul.f32 %v1661, %v1712
      %v1720 = vmul.f32 %v1666, %v1712
      %v1721 = vmul.f32 %v1671, %v1712
      %v1722 = vmul.f32 %v1676, %v1712
      %v1723 = vmul.f32 %v1681, %v1712
      %v1724 = vmul.f32 %v1686, %v1712
      %v1725 = vmul.f32 %v1691, %v1712
      %v1726 = vmul.f32 %v1696, %v1712
      %v1727 = vmul.f32 %v1701, %v1712
      %v1728 = vmul.f32 %v1706, %v1712
      %v1729 = vlaneseq
      %v1730 = vshrl.u32 %v1729, 7
      %v1731 = vsub.s32 3, %v1730
      %v1732 = vrot.slane %v188, %v1731
      %v1733 = vadd.f32 %v1713, %v1732
      %v1734 = vadd.f32 %v1714, %v1732
      %v1735 = vadd.f32 %v1715, %v1732
      %v1736 = vadd.f32 %v1716, %v1732
      %v1737 = vadd.f32 %v1717, %v1732
      %v1738 = vadd.f32 %v1718, %v1732
      %v1739 = vadd.f32 %v1719, %v1732
      %v1740 = vadd.f32 %v1720, %v1732
      %v1741 = vadd.f32 %v1721, %v1732
      %v1742 = vadd.f32 %v1722, %v1732
      %v1743 = vadd.f32 %v1723, %v1732
      %v1744 = vadd.f32 %v1724, %v1732
      %v1745 = vadd.f32 %v1725, %v1732
      %v1746 = vadd.f32 %v1726, %v1732
      %v1747 = vadd.f32 %v1727, %v1732
      %v1748 = vadd.f32 %v1728, %v1732
      %v1749 = vmax.f32 %v1733, 0.0
      %v1750 = vmax.f32 %v1734, 0.0
      %v1751 = vmax.f32 %v1735, 0.0
      %v1752 = vmax.f32 %v1736, 0.0
      %v1753 = vmax.f32 %v1737, 0.0
      %v1754 = vmax.f32 %v1738, 0.0
      %v1755 = vmax.f32 %v1739, 0.0
      %v1756 = vmax.f32 %v1740, 0.0
      %v1757 = vmax.f32 %v1741, 0.0
      %v1758 = vmax.f32 %v1742, 0.0
      %v1759 = vmax.f32 %v1743, 0.0
      %v1760 = vmax.f32 %v1744, 0.0
      %v1761 = vmax.f32 %v1745, 0.0
      %v1762 = vmax.f32 %v1746, 0.0
      %v1763 = vmax.f32 %v1747, 0.0
      %v1764 = vmax.f32 %v1748, 0.0
      %vm1765 = vcmask 122880
      %1766 = vst.msk [vmem:[#allocation4] sm:$0x1] %vm1765, 0.0
      %1767 = vst.msk [vmem:[#allocation4 + $0x18] sm:$0x1] %vm1765, 0.0
      %1768 = vst.msk [vmem:[#allocation4 + $0x30] sm:$0x1] %vm1765, 0.0
      %1769 = vst.msk [vmem:[#allocation4 + $0x48] sm:$0x1] %vm1765, 0.0
      %1770 = vst.msk [vmem:[#allocation4 + $0x60] sm:$0x1] %vm1765, 0.0
      %1771 = vst.msk [vmem:[#allocation4 + $0x78] sm:$0x1] %vm1765, 0.0
      %1772 = vst.msk [vmem:[#allocation4 + $0x90] sm:$0x1] %vm1765, 0.0
      %1773 = vst.msk [vmem:[#allocation4 + $0xa8] sm:$0x1] %vm1765, 0.0
      %1774 = vst.msk [vmem:[#allocation4 + $0x11] sm:$0x1] %vm1765, 0.0
      %1775 = vst.msk [vmem:[#allocation4 + $0x29] sm:$0x1] %vm1765, 0.0
      %1776 = vst.msk [vmem:[#allocation4 + $0x41] sm:$0x1] %vm1765, 0.0
      %1777 = vst.msk [vmem:[#allocation4 + $0x59] sm:$0x1] %vm1765, 0.0
      %1778 = vst.msk [vmem:[#allocation4 + $0x71] sm:$0x1] %vm1765, 0.0
      %1779 = vst.msk [vmem:[#allocation4 + $0x89] sm:$0x1] %vm1765, 0.0
      %1780 = vst.msk [vmem:[#allocation4 + $0xa1] sm:$0x1] %vm1765, 0.0
      %1781 = vst.msk [vmem:[#allocation4 + $0xb9] sm:$0x1] %vm1765, 0.0
      %1782 = vst.msk [vmem:[#allocation4 + $0x1] sm:$0xff] %vm641, %v1749
      %1783 = vst.msk [vmem:[#allocation4 + $0x9] sm:$0xff] %vm641, %v1750
      %1784 = vst.msk [vmem:[#allocation4 + $0x19] sm:$0xff] %vm641, %v1751
      %1785 = vst.msk [vmem:[#allocation4 + $0x21] sm:$0xff] %vm641, %v1752
      %1786 = vst.msk [vmem:[#allocation4 + $0x31] sm:$0xff] %vm641, %v1753
      %1787 = vst.msk [vmem:[#allocation4 + $0x39] sm:$0xff] %vm641, %v1754
      %1788 = vst.msk [vmem:[#allocation4 + $0x49] sm:$0xff] %vm641, %v1755
      %1789 = vst.msk [vmem:[#allocation4 + $0x51] sm:$0xff] %vm641, %v1756
      %1790 = vst.msk [vmem:[#allocation4 + $0x61] sm:$0xff] %vm641, %v1757
      %1791 = vst.msk [vmem:[#allocation4 + $0x69] sm:$0xff] %vm641, %v1758
      %1792 = vst.msk [vmem:[#allocation4 + $0x79] sm:$0xff] %vm641, %v1759
      %1793 = vst.msk [vmem:[#allocation4 + $0x81] sm:$0xff] %vm641, %v1760
      %1794 = vst.msk [vmem:[#allocation4 + $0x91] sm:$0xff] %vm641, %v1761
      %1795 = vst.msk [vmem:[#allocation4 + $0x99] sm:$0xff] %vm641, %v1762
      %1796 = vst.msk [vmem:[#allocation4 + $0xa9] sm:$0xff] %vm641, %v1763
      %1797 = vst.msk [vmem:[#allocation4 + $0xb1] sm:$0xff] %vm641, %v1764
      %v1798 = vld [vmem:[#allocation4] sm:$0xff]
      %v1799 = vld [vmem:[#allocation4 + $0x8] sm:$0xff]
      %v1800 = vld [vmem:[#allocation4 + $0x18] sm:$0xff]
      %v1801 = vld [vmem:[#allocation4 + $0x20] sm:$0xff]
      %v1802 = vld [vmem:[#allocation4 + $0x30] sm:$0xff]
      %v1803 = vld [vmem:[#allocation4 + $0x38] sm:$0xff]
      %v1804 = vld [vmem:[#allocation4 + $0x48] sm:$0xff]
      %v1805 = vld [vmem:[#allocation4 + $0x50] sm:$0xff]
      %v1806 = vld [vmem:[#allocation4 + $0x60] sm:$0xff]
      %v1807 = vld [vmem:[#allocation4 + $0x68] sm:$0xff]
      %v1808 = vld [vmem:[#allocation4 + $0x78] sm:$0xff]
      %v1809 = vld [vmem:[#allocation4 + $0x80] sm:$0xff]
      %v1810 = vld [vmem:[#allocation4 + $0x90] sm:$0xff]
      %v1811 = vld [vmem:[#allocation4 + $0x98] sm:$0xff]
      %v1812 = vld [vmem:[#allocation4 + $0xa8] sm:$0xff]
      %v1813 = vld [vmem:[#allocation4 + $0xb0] sm:$0xff]
      %v1814 = vld [vmem:[#allocation4 + $0x1] sm:$0xff]
      %v1815 = vld [vmem:[#allocation4 + $0x9] sm:$0xff]
      %v1816 = vld [vmem:[#allocation4 + $0x19] sm:$0xff]
      %v1817 = vld [vmem:[#allocation4 + $0x21] sm:$0xff]
      %v1818 = vld [vmem:[#allocation4 + $0x31] sm:$0xff]
      %v1819 = vld [vmem:[#allocation4 + $0x39] sm:$0xff]
      %v1820 = vld [vmem:[#allocation4 + $0x49] sm:$0xff]
      %v1821 = vld [vmem:[#allocation4 + $0x51] sm:$0xff]
      %v1822 = vld [vmem:[#allocation4 + $0x61] sm:$0xff]
      %v1823 = vld [vmem:[#allocation4 + $0x69] sm:$0xff]
      %v1824 = vld [vmem:[#allocation4 + $0x79] sm:$0xff]
      %v1825 = vld [vmem:[#allocation4 + $0x81] sm:$0xff]
      %v1826 = vld [vmem:[#allocation4 + $0x91] sm:$0xff]
      %v1827 = vld [vmem:[#allocation4 + $0x99] sm:$0xff]
      %v1828 = vld [vmem:[#allocation4 + $0xa9] sm:$0xff]
      %v1829 = vld [vmem:[#allocation4 + $0xb1] sm:$0xff]
      %v1830 = vld [vmem:[#allocation4 + $0x2] sm:$0xff]
      %v1831 = vld [vmem:[#allocation4 + $0xa] sm:$0xff]
      %v1832 = vld [vmem:[#allocation4 + $0x1a] sm:$0xff]
      %v1833 = vld [vmem:[#allocation4 + $0x22] sm:$0xff]
      %v1834 = vld [vmem:[#allocation4 + $0x32] sm:$0xff]
      %v1835 = vld [vmem:[#allocation4 + $0x3a] sm:$0xff]
      %v1836 = vld [vmem:[#allocation4 + $0x4a] sm:$0xff]
      %v1837 = vld [vmem:[#allocation4 + $0x52] sm:$0xff]
      %v1838 = vld [vmem:[#allocation4 + $0x62] sm:$0xff]
      %v1839 = vld [vmem:[#allocation4 + $0x6a] sm:$0xff]
      %v1840 = vld [vmem:[#allocation4 + $0x7a] sm:$0xff]
      %v1841 = vld [vmem:[#allocation4 + $0x82] sm:$0xff]
      %v1842 = vld [vmem:[#allocation4 + $0x92] sm:$0xff]
      %v1843 = vld [vmem:[#allocation4 + $0x9a] sm:$0xff]
      %v1844 = vld [vmem:[#allocation4 + $0xaa] sm:$0xff]
      %v1845 = vld [vmem:[#allocation4 + $0xb2] sm:$0xff]
      %1862 = vrot.lane.b32.xlu0 %v1814, 16
      %v1863 = vpop.permute.xlu0 %1862
      %1864 = vrot.lane.b32.xlu0 %v1815, 16
      %v1865 = vpop.permute.xlu0 %1864
      %1866 = vrot.lane.b32.xlu0 %v1816, 16
      %v1867 = vpop.permute.xlu0 %1866
      %1868 = vrot.lane.b32.xlu0 %v1817, 16
      %v1869 = vpop.permute.xlu0 %1868
      %1870 = vrot.lane.b32.xlu0 %v1818, 16
      %v1871 = vpop.permute.xlu0 %1870
      %1872 = vrot.lane.b32.xlu0 %v1819, 16
      %v1873 = vpop.permute.xlu0 %1872
      %1874 = vrot.lane.b32.xlu0 %v1820, 16
      %v1875 = vpop.permute.xlu0 %1874
      %1876 = vrot.lane.b32.xlu0 %v1821, 16
      %v1877 = vpop.permute.xlu0 %1876
      %1878 = vrot.lane.b32.xlu0 %v1822, 16
      %v1879 = vpop.permute.xlu0 %1878
      %1880 = vrot.lane.b32.xlu0 %v1823, 16
      %v1881 = vpop.permute.xlu0 %1880
      %1882 = vrot.lane.b32.xlu0 %v1824, 16
      %v1883 = vpop.permute.xlu0 %1882
      %1884 = vrot.lane.b32.xlu0 %v1825, 16
      %v1885 = vpop.permute.xlu0 %1884
      %1886 = vrot.lane.b32.xlu0 %v1826, 16
      %v1887 = vpop.permute.xlu0 %1886
      %1888 = vrot.lane.b32.xlu0 %v1827, 16
      %v1889 = vpop.permute.xlu0 %1888
      %1890 = vrot.lane.b32.xlu0 %v1828, 16
      %v1891 = vpop.permute.xlu0 %1890
      %1892 = vrot.lane.b32.xlu0 %v1829, 16
      %v1893 = vpop.permute.xlu0 %1892
      %1926 = vrot.lane.b32.xlu0 %v1830, 32
      %v1927 = vpop.permute.xlu0 %1926
      %1928 = vrot.lane.b32.xlu0 %v1831, 32
      %v1929 = vpop.permute.xlu0 %1928
      %1930 = vrot.lane.b32.xlu0 %v1832, 32
      %v1931 = vpop.permute.xlu0 %1930
      %1932 = vrot.lane.b32.xlu0 %v1833, 32
      %v1933 = vpop.permute.xlu0 %1932
      %1934 = vrot.lane.b32.xlu0 %v1834, 32
      %v1935 = vpop.permute.xlu0 %1934
      %1936 = vrot.lane.b32.xlu0 %v1835, 32
      %v1937 = vpop.permute.xlu0 %1936
      %1938 = vrot.lane.b32.xlu0 %v1836, 32
      %v1939 = vpop.permute.xlu0 %1938
      %1940 = vrot.lane.b32.xlu0 %v1837, 32
      %v1941 = vpop.permute.xlu0 %1940
      %1942 = vrot.lane.b32.xlu0 %v1838, 32
      %v1943 = vpop.permute.xlu0 %1942
      %1944 = vrot.lane.b32.xlu0 %v1839, 32
      %v1945 = vpop.permute.xlu0 %1944
      %1946 = vrot.lane.b32.xlu0 %v1840, 32
      %v1947 = vpop.permute.xlu0 %1946
      %1948 = vrot.lane.b32.xlu0 %v1841, 32
      %v1949 = vpop.permute.xlu0 %1948
      %1950 = vrot.lane.b32.xlu0 %v1842, 32
      %v1951 = vpop.permute.xlu0 %1950
      %1952 = vrot.lane.b32.xlu0 %v1843, 32
      %v1953 = vpop.permute.xlu0 %1952
      %1954 = vrot.lane.b32.xlu0 %v1844, 32
      %v1955 = vpop.permute.xlu0 %1954
      %1956 = vrot.lane.b32.xlu0 %v1845, 32
      %v1957 = vpop.permute.xlu0 %1956
      %v1974 = vsel %vm641, %v1798, %v1863
      %v1975 = vsel %vm641, %v1799, %v1865
      %v1976 = vsel %vm641, %v1800, %v1867
      %v1977 = vsel %vm641, %v1801, %v1869
      %v1978 = vsel %vm641, %v1802, %v1871
      %v1979 = vsel %vm641, %v1803, %v1873
      %v1980 = vsel %vm641, %v1804, %v1875
      %v1981 = vsel %vm641, %v1805, %v1877
      %v1982 = vsel %vm641, %v1806, %v1879
      %v1983 = vsel %vm641, %v1807, %v1881
      %v1984 = vsel %vm641, %v1808, %v1883
      %v1985 = vsel %vm641, %v1809, %v1885
      %v1986 = vsel %vm641, %v1810, %v1887
      %v1987 = vsel %vm641, %v1811, %v1889
      %v1988 = vsel %vm641, %v1812, %v1891
      %v1989 = vsel %vm641, %v1813, %v1893
      %vm1990 = vcmask 261120
      %v1991 = vsel %vm1990, %v1974, %v1927
      %v1992 = vsel %vm1990, %v1975, %v1929
      %v1993 = vsel %vm1990, %v1976, %v1931
      %v1994 = vsel %vm1990, %v1977, %v1933
      %v1995 = vsel %vm1990, %v1978, %v1935
      %v1996 = vsel %vm1990, %v1979, %v1937
      %v1997 = vsel %vm1990, %v1980, %v1939
      %v1998 = vsel %vm1990, %v1981, %v1941
      %v1999 = vsel %vm1990, %v1982, %v1943
      %v2000 = vsel %vm1990, %v1983, %v1945
      %v2001 = vsel %vm1990, %v1984, %v1947
      %v2002 = vsel %vm1990, %v1985, %v1949
      %v2003 = vsel %vm1990, %v1986, %v1951
      %v2004 = vsel %vm1990, %v1987, %v1953
      %v2005 = vsel %vm1990, %v1988, %v1955
      %v2006 = vsel %vm1990, %v1989, %v1957
      %vm2007 = vcmask 392192
      %v2009 = vsel %vm2007, %v1991, 0
      %v2012 = vsel %vm2007, %v1992, 0
      %v2015 = vsel %vm2007, %v1993, 0
      %v2018 = vsel %vm2007, %v1994, 0
      %v2021 = vsel %vm2007, %v1995, 0
      %v2024 = vsel %vm2007, %v1996, 0
      %v2027 = vsel %vm2007, %v1997, 0
      %v2030 = vsel %vm2007, %v1998, 0
      %v2033 = vsel %vm2007, %v1999, 0
      %v2036 = vsel %vm2007, %v2000, 0
      %v2039 = vsel %vm2007, %v2001, 0
      %v2042 = vsel %vm2007, %v2002, 0
      %v2045 = vsel %vm2007, %v2003, 0
      %v2048 = vsel %vm2007, %v2004, 0
      %v2051 = vsel %vm2007, %v2005, 0
      %v2054 = vsel %vm2007, %v2006, 0
      %2056 = vmatprep.subr.mxu0 0.0
      %2057 = vmatpush1.msra.mxu0 %v180
      %2058 = vmatprep.subr.mxu0 0.0
      %2059 = vmatpush1.msra.mxu0 %v181
      %2060 = vmatprep.subr.mxu0 0.0
      %2061 = vmatpush1.msra.mxu0 %v182
      %2062 = vmatprep.subr.mxu0 0.0
      %2063 = vmatpush1.msra.mxu0 %v183
      %2064 = vmatprep.subr.mxu0 0.0
      %2065 = vmatpush1.msra.mxu0 %v184
      %2066 = vmatprep.subr.mxu0 0.0
      %2067 = vmatpush1.msra.mxu0 %v185
      %2068 = vmatprep.subr.mxu0 0.0
      %2069 = vmatpush1.msra.mxu0 0.0
      %2070 = vmatprep.subr.mxu0 0.0
      %2071 = vmatpush1.msra.mxu0 0.0
      %2072 = vmatprep.subr.mxu0 0.0
      %2073 = vmatpush1.msra.mxu0 0.0
      %2074 = vmatprep.subr.mxu0 0.0
      %2075 = vmatpush1.msra.mxu0 0.0
      %2076 = vmatprep.subr.mxu0 0.0
      %2077 = vmatpush1.msra.mxu0 0.0
      %2078 = vmatprep.subr.mxu0 0.0
      %2079 = vmatpush1.msra.mxu0 0.0
      %2080 = vmatprep.subr.mxu0 0.0
      %2081 = vmatpush1.msra.mxu0 0.0
      %2082 = vmatprep.subr.mxu0 0.0
      %2083 = vmatpush1.msra.mxu0 0.0
      %2084 = vmatprep.subr.mxu0 0.0
      %2085 = vmatpush1.msra.mxu0 0.0
      %2086 = vmatprep.subr.mxu0 0.0
      %2087 = vmatpush1.msra.mxu0 0.0
      %2088 = vmatprep.subr.mxu0 0.0
      %2089 = vmatpush1.msra.mxu0 0.0
      %2090 = vmatprep.subr.mxu0 0.0
      %2091 = vmatpush1.msra.mxu0 0.0
      %2092 = vmatprep.subr.mxu0 0.0
      %2093 = vmatpush1.msra.mxu0 0.0
      %2094 = vmatprep.subr.mxu0 0.0
      %2095 = vmatpush1.msra.mxu0 0.0
      %2096 = vmatprep.subr.mxu0 0.0
      %2097 = vmatpush1.msra.mxu0 0.0
      %2098 = vmatprep.subr.mxu0 0.0
      %2099 = vmatpush1.msra.mxu0 0.0
      %2100 = vmatprep.subr.mxu0 0.0
      %2101 = vmatpush1.msra.mxu0 0.0
      %2102 = vmatprep.subr.mxu0 0.0
      %2103 = vmatpush1.msra.mxu0 0.0
      %2104 = vmatprep.subr.mxu0 0.0
      %2105 = vmatpush1.msra.mxu0 0.0
      %2106 = vmatprep.subr.mxu0 0.0
      %2107 = vmatpush1.msra.mxu0 0.0
      %2108 = vmatprep.subr.mxu0 0.0
      %2109 = vmatpush1.msra.mxu0 0.0
      %2110 = vmatprep.subr.mxu0 0.0
      %2111 = vmatpush1.msra.mxu0 0.0
      %2112 = vmatprep.subr.mxu0 0.0
      %2113 = vmatpush1.msra.mxu0 0.0
      %2114 = vmatprep.subr.mxu0 0.0
      %2115 = vmatpush1.msra.mxu0 0.0
      %2116 = vmatprep.subr.mxu0 0.0
      %2117 = vmatpush1.msra.mxu0 0.0
      %2118 = vmatprep.subr.mxu0 0.0
      %2119 = vmatpush1.msra.mxu0 0.0
      %2120 = vmatprep.mubr.f32.mxu0 0.0
      %2121 = vmatmul.mubr.f32.gmra.mrb[0].mxu0 %v2009
      %v2122 = vpop.f32.mrb[0].mxu0
      %v2123 = vadd.f32 0.0, %v2122
      %v2124 = vpop.f32.mrb[0].mxu0
      %2125 = vmatprep.mubr.f32.mxu0 0.0
      %2126 = vmatmul.mubr.f32.gmra.mrb[0].mxu0 %v2012
      %v2127 = vpop.f32.mrb[0].mxu0
      %v2128 = vadd.f32 0.0, %v2127
      %v2129 = vpop.f32.mrb[0].mxu0
      %2130 = vmatprep.mubr.f32.mxu0 0.0
      %2131 = vmatmul.mubr.f32.gmra.mrb[0].mxu0 %v2015
      %v2132 = vpop.f32.mrb[0].mxu0
      %v2133 = vadd.f32 0.0, %v2132
      %v2134 = vpop.f32.mrb[0].mxu0
      %2135 = vmatprep.mubr.f32.mxu0 0.0
      %2136 = vmatmul.mubr.f32.gmra.mrb[0].mxu0 %v2018
      %v2137 = vpop.f32.mrb[0].mxu0
      %v2138 = vadd.f32 0.0, %v2137
      %v2139 = vpop.f32.mrb[0].mxu0
      %2140 = vmatprep.mubr.f32.mxu0 0.0
      %2141 = vmatmul.mubr.f32.gmra.mrb[0].mxu0 %v2021
      %v2142 = vpop.f32.mrb[0].mxu0
      %v2143 = vadd.f32 0.0, %v2142
      %v2144 = vpop.f32.mrb[0].mxu0
      %2145 = vmatprep.mubr.f32.mxu0 0.0
      %2146 = vmatmul.mubr.f32.gmra.mrb[0].mxu0 %v2024
      %v2147 = vpop.f32.mrb[0].mxu0
      %v2148 = vadd.f32 0.0, %v2147
      %v2149 = vpop.f32.mrb[0].mxu0
      %2150 = vmatprep.mubr.f32.mxu0 0.0
      %2151 = vmatmul.mubr.f32.gmra.mrb[0].mxu0 %v2027
      %v2152 = vpop.f32.mrb[0].mxu0
      %v2153 = vadd.f32 0.0, %v2152
      %v2154 = vpop.f32.mrb[0].mxu0
      %2155 = vmatprep.mubr.f32.mxu0 0.0
      %2156 = vmatmul.mubr.f32.gmra.mrb[0].mxu0 %v2030
      %v2157 = vpop.f32.mrb[0].mxu0
      %v2158 = vadd.f32 0.0, %v2157
      %v2159 = vpop.f32.mrb[0].mxu0
      %2160 = vmatprep.mubr.f32.mxu0 0.0
      %2161 = vmatmul.mubr.f32.gmra.mrb[0].mxu0 %v2033
      %v2162 = vpop.f32.mrb[0].mxu0
      %v2163 = vadd.f32 0.0, %v2162
      %v2164 = vpop.f32.mrb[0].mxu0
      %2165 = vmatprep.mubr.f32.mxu0 0.0
      %2166 = vmatmul.mubr.f32.gmra.mrb[0].mxu0 %v2036
      %v2167 = vpop.f32.mrb[0].mxu0
      %v2168 = vadd.f32 0.0, %v2167
      %v2169 = vpop.f32.mrb[0].mxu0
      %2170 = vmatprep.mubr.f32.mxu0 0.0
      %2171 = vmatmul.mubr.f32.gmra.mrb[0].mxu0 %v2039
      %v2172 = vpop.f32.mrb[0].mxu0
      %v2173 = vadd.f32 0.0, %v2172
      %v2174 = vpop.f32.mrb[0].mxu0
      %2175 = vmatprep.mubr.f32.mxu0 0.0
      %2176 = vmatmul.mubr.f32.gmra.mrb[0].mxu0 %v2042
      %v2177 = vpop.f32.mrb[0].mxu0
      %v2178 = vadd.f32 0.0, %v2177
      %v2179 = vpop.f32.mrb[0].mxu0
      %2180 = vmatprep.mubr.f32.mxu0 0.0
      %2181 = vmatmul.mubr.f32.gmra.mrb[0].mxu0 %v2045
      %v2182 = vpop.f32.mrb[0].mxu0
      %v2183 = vadd.f32 0.0, %v2182
      %v2184 = vpop.f32.mrb[0].mxu0
      %2185 = vmatprep.mubr.f32.mxu0 0.0
      %2186 = vmatmul.mubr.f32.gmra.mrb[0].mxu0 %v2048
      %v2187 = vpop.f32.mrb[0].mxu0
      %v2188 = vadd.f32 0.0, %v2187
      %v2189 = vpop.f32.mrb[0].mxu0
      %2190 = vmatprep.mubr.f32.mxu0 0.0
      %2191 = vmatmul.mubr.f32.gmra.mrb[0].mxu0 %v2051
      %v2192 = vpop.f32.mrb[0].mxu0
      %v2193 = vadd.f32 0.0, %v2192
      %v2194 = vpop.f32.mrb[0].mxu0
      %2195 = vmatprep.mubr.f32.mxu0 0.0
      %2196 = vmatmul.mubr.f32.gmra.mrb[0].mxu0 %v2054
      %v2197 = vpop.f32.mrb[0].mxu0
      %v2198 = vadd.f32 0.0, %v2197
      %v2199 = vpop.f32.mrb[0].mxu0
      %2200 = vdwg.mxu0
      %v2201 = vlaneseq
      %v2202 = vshrl.u32 %v2201, 7
      %v2203 = vsub.s32 4, %v2202
      %v2204 = vrot.slane %v188, %v2203
      %v2205 = vmul.f32 %v2123, %v2204
      %v2206 = vmul.f32 %v2128, %v2204
      %v2207 = vmul.f32 %v2133, %v2204
      %v2208 = vmul.f32 %v2138, %v2204
      %v2209 = vmul.f32 %v2143, %v2204
      %v2210 = vmul.f32 %v2148, %v2204
      %v2211 = vmul.f32 %v2153, %v2204
      %v2212 = vmul.f32 %v2158, %v2204
      %v2213 = vmul.f32 %v2163, %v2204
      %v2214 = vmul.f32 %v2168, %v2204
      %v2215 = vmul.f32 %v2173, %v2204
      %v2216 = vmul.f32 %v2178, %v2204
      %v2217 = vmul.f32 %v2183, %v2204
      %v2218 = vmul.f32 %v2188, %v2204
      %v2219 = vmul.f32 %v2193, %v2204
      %v2220 = vmul.f32 %v2198, %v2204
      %v2221 = vlaneseq
      %v2222 = vshrl.u32 %v2221, 7
      %v2223 = vsub.s32 5, %v2222
      %v2224 = vrot.slane %v188, %v2223
      %v2225 = vadd.f32 %v2205, %v2224
      %v2226 = vadd.f32 %v2206, %v2224
      %v2227 = vadd.f32 %v2207, %v2224
      %v2228 = vadd.f32 %v2208, %v2224
      %v2229 = vadd.f32 %v2209, %v2224
      %v2230 = vadd.f32 %v2210, %v2224
      %v2231 = vadd.f32 %v2211, %v2224
      %v2232 = vadd.f32 %v2212, %v2224
      %v2233 = vadd.f32 %v2213, %v2224
      %v2234 = vadd.f32 %v2214, %v2224
      %v2235 = vadd.f32 %v2215, %v2224
      %v2236 = vadd.f32 %v2216, %v2224
      %v2237 = vadd.f32 %v2217, %v2224
      %v2238 = vadd.f32 %v2218, %v2224
      %v2239 = vadd.f32 %v2219, %v2224
      %v2240 = vadd.f32 %v2220, %v2224
      %v2241 = vmax.f32 %v2225, 0.0
      %v2242 = vmax.f32 %v2226, 0.0
      %v2243 = vmax.f32 %v2227, 0.0
      %v2244 = vmax.f32 %v2228, 0.0
      %v2245 = vmax.f32 %v2229, 0.0
      %v2246 = vmax.f32 %v2230, 0.0
      %v2247 = vmax.f32 %v2231, 0.0
      %v2248 = vmax.f32 %v2232, 0.0
      %v2249 = vmax.f32 %v2233, 0.0
      %v2250 = vmax.f32 %v2234, 0.0
      %v2251 = vmax.f32 %v2235, 0.0
      %v2252 = vmax.f32 %v2236, 0.0
      %v2253 = vmax.f32 %v2237, 0.0
      %v2254 = vmax.f32 %v2238, 0.0
      %v2255 = vmax.f32 %v2239, 0.0
      %v2256 = vmax.f32 %v2240, 0.0
      %2257 = vst.msk [vmem:[#allocation5] sm:$0xff] %vm641, %v2241
      %2258 = vst.msk [vmem:[#allocation5 + $0x8] sm:$0xff] %vm641, %v2242
      %2259 = vst.msk [vmem:[#allocation5 + $0x10] sm:$0xff] %vm641, %v2243
      %2260 = vst.msk [vmem:[#allocation5 + $0x18] sm:$0xff] %vm641, %v2244
      %2261 = vst.msk [vmem:[#allocation5 + $0x20] sm:$0xff] %vm641, %v2245
      %2262 = vst.msk [vmem:[#allocation5 + $0x28] sm:$0xff] %vm641, %v2246
      %2263 = vst.msk [vmem:[#allocation5 + $0x30] sm:$0xff] %vm641, %v2247
      %2264 = vst.msk [vmem:[#allocation5 + $0x38] sm:$0xff] %vm641, %v2248
      %2265 = vst.msk [vmem:[#allocation5 + $0x40] sm:$0xff] %vm641, %v2249
      %2266 = vst.msk [vmem:[#allocation5 + $0x48] sm:$0xff] %vm641, %v2250
      %2267 = vst.msk [vmem:[#allocation5 + $0x50] sm:$0xff] %vm641, %v2251
      %2268 = vst.msk [vmem:[#allocation5 + $0x58] sm:$0xff] %vm641, %v2252
      %2269 = vst.msk [vmem:[#allocation5 + $0x60] sm:$0xff] %vm641, %v2253
      %2270 = vst.msk [vmem:[#allocation5 + $0x68] sm:$0xff] %vm641, %v2254
      %2271 = vst.msk [vmem:[#allocation5 + $0x70] sm:$0xff] %vm641, %v2255
      %2272 = vst.msk [vmem:[#allocation5 + $0x78] sm:$0xff] %vm641, %v2256
      %v2273 = vld [vmem:[#allocation5] ss:$2 sm:$0xff]
      %s2274 = scalar_lea.vmem [#allocation5], 16
      %v2275 = vld [vmem:[%s2274] ss:$2 sm:$0xff]
      %s2276 = scalar_lea.vmem [#allocation5], 32
      %v2277 = vld [vmem:[%s2276] ss:$2 sm:$0xff]
      %s2278 = scalar_lea.vmem [#allocation5], 48
      %v2279 = vld [vmem:[%s2278] ss:$2 sm:$0xff]
      %s2280 = scalar_lea.vmem [#allocation5], 64
      %v2281 = vld [vmem:[%s2280] ss:$2 sm:$0xff]
      %s2282 = scalar_lea.vmem [#allocation5], 80
      %v2283 = vld [vmem:[%s2282] ss:$2 sm:$0xff]
      %s2284 = scalar_lea.vmem [#allocation5], 96
      %v2285 = vld [vmem:[%s2284] ss:$2 sm:$0xff]
      %s2286 = scalar_lea.vmem [#allocation5], 112
      %v2287 = vld [vmem:[%s2286] ss:$2 sm:$0xff]
      %s2288 = scalar_lea.vmem [#allocation5], 1
      %v2289 = vld [vmem:[%s2288] ss:$2 sm:$0xff]
      %s2290 = scalar_lea.vmem [#allocation5], 17
      %v2291 = vld [vmem:[%s2290] ss:$2 sm:$0xff]
      %s2292 = scalar_lea.vmem [#allocation5], 33
      %v2293 = vld [vmem:[%s2292] ss:$2 sm:$0xff]
      %s2294 = scalar_lea.vmem [#allocation5], 49
      %v2295 = vld [vmem:[%s2294] ss:$2 sm:$0xff]
      %s2296 = scalar_lea.vmem [#allocation5], 65
      %v2297 = vld [vmem:[%s2296] ss:$2 sm:$0xff]
      %s2298 = scalar_lea.vmem [#allocation5], 81
      %v2299 = vld [vmem:[%s2298] ss:$2 sm:$0xff]
      %s2300 = scalar_lea.vmem [#allocation5], 97
      %v2301 = vld [vmem:[%s2300] ss:$2 sm:$0xff]
      %s2302 = scalar_lea.vmem [#allocation5], 113
      %v2303 = vld [vmem:[%s2302] ss:$2 sm:$0xff]
      %v2304 = vmax.f32 %v2273, %v2289
      %v2305 = vmax.f32 %v2275, %v2291
      %v2306 = vmax.f32 %v2277, %v2293
      %v2307 = vmax.f32 %v2279, %v2295
      %v2308 = vmax.f32 %v2281, %v2297
      %v2309 = vmax.f32 %v2283, %v2299
      %v2310 = vmax.f32 %v2285, %v2301
      %v2311 = vmax.f32 %v2287, %v2303
      %v2312 = vlaneseq
      %v2313 = vshrl.u32 %v2312, 7
      %v2314 = vsub.s32 6, %v2313
      %v2315 = vrot.slane %v188, %v2314
      %v2317 = vsel %vm641, %v2304, 0
      %v2320 = vsel %vm641, %v2305, 0
      %v2323 = vsel %vm641, %v2306, 0
      %v2326 = vsel %vm641, %v2307, 0
      %v2329 = vsel %vm641, %v2308, 0
      %v2332 = vsel %vm641, %v2309, 0
      %v2335 = vsel %vm641, %v2310, 0
      %v2338 = vsel %vm641, %v2311, 0
      %2340 = vmatprep.subr.mxu0 0.0
      %2341 = vmatpush1.msra.mxu0 %v186
      %2342 = vmatprep.subr.mxu0 0.0
      %2343 = vmatpush1.msra.mxu0 %v187
      %2344 = vmatprep.subr.mxu0 0.0
      %2345 = vmatpush1.msra.mxu0 0.0
      %2346 = vmatprep.subr.mxu0 0.0
      %2347 = vmatpush1.msra.mxu0 0.0
      %2348 = vmatprep.subr.mxu0 0.0
      %2349 = vmatpush1.msra.mxu0 0.0
      %2350 = vmatprep.subr.mxu0 0.0
      %2351 = vmatpush1.msra.mxu0 0.0
      %2352 = vmatprep.subr.mxu0 0.0
      %2353 = vmatpush1.msra.mxu0 0.0
      %2354 = vmatprep.subr.mxu0 0.0
      %2355 = vmatpush1.msra.mxu0 0.0
      %2356 = vmatprep.subr.mxu0 0.0
      %2357 = vmatpush1.msra.mxu0 0.0
      %2358 = vmatprep.subr.mxu0 0.0
      %2359 = vmatpush1.msra.mxu0 0.0
      %2360 = vmatprep.subr.mxu0 0.0
      %2361 = vmatpush1.msra.mxu0 0.0
      %2362 = vmatprep.subr.mxu0 0.0
      %2363 = vmatpush1.msra.mxu0 0.0
      %2364 = vmatprep.subr.mxu0 0.0
      %2365 = vmatpush1.msra.mxu0 0.0
      %2366 = vmatprep.subr.mxu0 0.0
      %2367 = vmatpush1.msra.mxu0 0.0
      %2368 = vmatprep.subr.mxu0 0.0
      %2369 = vmatpush1.msra.mxu0 0.0
      %2370 = vmatprep.subr.mxu0 0.0
      %2371 = vmatpush1.msra.mxu0 0.0
      %2372 = vmatprep.subr.mxu0 0.0
      %2373 = vmatpush1.msra.mxu0 0.0
      %2374 = vmatprep.subr.mxu0 0.0
      %2375 = vmatpush1.msra.mxu0 0.0
      %2376 = vmatprep.subr.mxu0 0.0
      %2377 = vmatpush1.msra.mxu0 0.0
      %2378 = vmatprep.subr.mxu0 0.0
      %2379 = vmatpush1.msra.mxu0 0.0
      %2380 = vmatprep.subr.mxu0 0.0
      %2381 = vmatpush1.msra.mxu0 0.0
      %2382 = vmatprep.subr.mxu0 0.0
      %2383 = vmatpush1.msra.mxu0 0.0
      %2384 = vmatprep.subr.mxu0 0.0
      %2385 = vmatpush1.msra.mxu0 0.0
      %2386 = vmatprep.subr.mxu0 0.0
      %2387 = vmatpush1.msra.mxu0 0.0
      %2388 = vmatprep.subr.mxu0 0.0
      %2389 = vmatpush1.msra.mxu0 0.0
      %2390 = vmatprep.subr.mxu0 0.0
      %2391 = vmatpush1.msra.mxu0 0.0
      %2392 = vmatprep.subr.mxu0 0.0
      %2393 = vmatpush1.msra.mxu0 0.0
      %2394 = vmatprep.subr.mxu0 0.0
      %2395 = vmatpush1.msra.mxu0 0.0
      %2396 = vmatprep.subr.mxu0 0.0
      %2397 = vmatpush1.msra.mxu0 0.0
      %2398 = vmatprep.subr.mxu0 0.0
      %2399 = vmatpush1.msra.mxu0 0.0
      %2400 = vmatprep.subr.mxu0 0.0
      %2401 = vmatpush1.msra.mxu0 0.0
      %2402 = vmatprep.subr.mxu0 0.0
      %2403 = vmatpush1.msra.mxu0 0.0
      %2404 = vmatprep.mubr.f32.mxu0 0.0
      %2405 = vmatmul.mubr.f32.gmra.mrb[0].mxu0 %v2317
      %v2406 = vpop.f32.mrb[0].mxu0
      %v2407 = vadd.f32 %v2315, %v2406
      %v2408 = vpop.f32.mrb[0].mxu0
      %2409 = vmatprep.mubr.f32.mxu0 0.0
      %2410 = vmatmul.mubr.f32.gmra.mrb[0].mxu0 %v2320
      %v2411 = vpop.f32.mrb[0].mxu0
      %v2412 = vadd.f32 %v2315, %v2411
      %v2413 = vpop.f32.mrb[0].mxu0
      %2414 = vmatprep.mubr.f32.mxu0 0.0
      %2415 = vmatmul.mubr.f32.gmra.mrb[0].mxu0 %v2323
      %v2416 = vpop.f32.mrb[0].mxu0
      %v2417 = vadd.f32 %v2315, %v2416
      %v2418 = vpop.f32.mrb[0].mxu0
      %2419 = vmatprep.mubr.f32.mxu0 0.0
      %2420 = vmatmul.mubr.f32.gmra.mrb[0].mxu0 %v2326
      %v2421 = vpop.f32.mrb[0].mxu0
      %v2422 = vadd.f32 %v2315, %v2421
      %v2423 = vpop.f32.mrb[0].mxu0
      %2424 = vmatprep.mubr.f32.mxu0 0.0
      %2425 = vmatmul.mubr.f32.gmra.mrb[0].mxu0 %v2329
      %v2426 = vpop.f32.mrb[0].mxu0
      %v2427 = vadd.f32 %v2315, %v2426
      %v2428 = vpop.f32.mrb[0].mxu0
      %2429 = vmatprep.mubr.f32.mxu0 0.0
      %2430 = vmatmul.mubr.f32.gmra.mrb[0].mxu0 %v2332
      %v2431 = vpop.f32.mrb[0].mxu0
      %v2432 = vadd.f32 %v2315, %v2431
      %v2433 = vpop.f32.mrb[0].mxu0
      %2434 = vmatprep.mubr.f32.mxu0 0.0
      %2435 = vmatmul.mubr.f32.gmra.mrb[0].mxu0 %v2335
      %v2436 = vpop.f32.mrb[0].mxu0
      %v2437 = vadd.f32 %v2315, %v2436
      %v2438 = vpop.f32.mrb[0].mxu0
      %2439 = vmatprep.mubr.f32.mxu0 0.0
      %2440 = vmatmul.mubr.f32.gmra.mrb[0].mxu0 %v2338
      %v2441 = vpop.f32.mrb[0].mxu0
      %v2442 = vadd.f32 %v2315, %v2441
      %v2443 = vpop.f32.mrb[0].mxu0
      %2444 = vdwg.mxu0
      %v2445 = vtanh.pop %v2407
      %v2446 = vtanh.pop %v2412
      %v2447 = vtanh.pop %v2417
      %v2448 = vtanh.pop %v2422
      %v2449 = vtanh.pop %v2427
      %v2450 = vtanh.pop %v2432
      %v2451 = vtanh.pop %v2437
      %v2452 = vtanh.pop %v2442
      %v2453 = vlaneseq
      %v2454 = vshrl.u32 %v2453, 7
      %v2455 = vsub.s32 7, %v2454
      %v2456 = vrot.slane %v188, %v2455
      %v2457 = vmul.f32 %v2445, %v2456
      %v2458 = vmul.f32 %v2446, %v2456
      %v2459 = vmul.f32 %v2447, %v2456
      %v2460 = vmul.f32 %v2448, %v2456
      %v2461 = vmul.f32 %v2449, %v2456
      %v2462 = vmul.f32 %v2450, %v2456
      %v2463 = vmul.f32 %v2451, %v2456
      %v2464 = vmul.f32 %v2452, %v2456
      %vm2465 = vcmask 31744
      %v2466 = vsel %vm2465, %v2457, 0.0
      %2467 = vadd.xlane.f32.xlu0 %v2466
      %v2468 = vpop.xlane.xlu0 %2467
      %v2469 = vsel %vm2465, %v2458, 0.0
      %2470 = vadd.xlane.f32.xlu0 %v2469
      %v2471 = vpop.xlane.xlu0 %2470
      %v2472 = vsel %vm2465, %v2459, 0.0
      %2473 = vadd.xlane.f32.xlu0 %v2472
      %v2474 = vpop.xlane.xlu0 %2473
      %v2475 = vsel %vm2465, %v2460, 0.0
      %2476 = vadd.xlane.f32.xlu0 %v2475
      %v2477 = vpop.xlane.xlu0 %2476
      %v2478 = vsel %vm2465, %v2461, 0.0
      %2479 = vadd.xlane.f32.xlu0 %v2478
      %v2480 = vpop.xlane.xlu0 %2479
      %v2481 = vsel %vm2465, %v2462, 0.0
      %2482 = vadd.xlane.f32.xlu0 %v2481
      %v2483 = vpop.xlane.xlu0 %2482
      %v2484 = vsel %vm2465, %v2463, 0.0
      %2485 = vadd.xlane.f32.xlu0 %v2484
      %v2486 = vpop.xlane.xlu0 %2485
      %v2487 = vsel %vm2465, %v2464, 0.0
      %2488 = vadd.xlane.f32.xlu0 %v2487
      %v2489 = vpop.xlane.xlu0 %2488
      %v2490 = vrot.slane %v2468, 4
      %v2491 = vmax.f32 %v2468, %v2490
      %v2492 = vrot.slane %v2491, 2
      %v2493 = vmax.f32 %v2491, %v2492
      %v2494 = vrot.slane %v2493, 1
      %v2495 = vmax.f32 %v2493, %v2494
      %v2496 = vrot.slane %v2471, 4
      %v2497 = vmax.f32 %v2471, %v2496
      %v2498 = vrot.slane %v2497, 2
      %v2499 = vmax.f32 %v2497, %v2498
      %v2500 = vrot.slane %v2499, 1
      %v2501 = vmax.f32 %v2499, %v2500
      %v2502 = vrot.slane %v2474, 4
      %v2503 = vmax.f32 %v2474, %v2502
      %v2504 = vrot.slane %v2503, 2
      %v2505 = vmax.f32 %v2503, %v2504
      %v2506 = vrot.slane %v2505, 1
      %v2507 = vmax.f32 %v2505, %v2506
      %v2508 = vrot.slane %v2477, 4
      %v2509 = vmax.f32 %v2477, %v2508
      %v2510 = vrot.slane %v2509, 2
      %v2511 = vmax.f32 %v2509, %v2510
      %v2512 = vrot.slane %v2511, 1
      %v2513 = vmax.f32 %v2511, %v2512
      %v2514 = vrot.slane %v2480, 4
      %v2515 = vmax.f32 %v2480, %v2514
      %v2516 = vrot.slane %v2515, 2
      %v2517 = vmax.f32 %v2515, %v2516
      %v2518 = vrot.slane %v2517, 1
      %v2519 = vmax.f32 %v2517, %v2518
      %v2520 = vrot.slane %v2483, 4
      %v2521 = vmax.f32 %v2483, %v2520
      %v2522 = vrot.slane %v2521, 2
      %v2523 = vmax.f32 %v2521, %v2522
      %v2524 = vrot.slane %v2523, 1
      %v2525 = vmax.f32 %v2523, %v2524
      %v2526 = vrot.slane %v2486, 4
      %v2527 = vmax.f32 %v2486, %v2526
      %v2528 = vrot.slane %v2527, 2
      %v2529 = vmax.f32 %v2527, %v2528
      %v2530 = vrot.slane %v2529, 1
      %v2531 = vmax.f32 %v2529, %v2530
      %v2532 = vrot.slane %v2489, 4
      %v2533 = vmax.f32 %v2489, %v2532
      %v2534 = vrot.slane %v2533, 2
      %v2535 = vmax.f32 %v2533, %v2534
      %v2536 = vrot.slane %v2535, 1
      %v2537 = vmax.f32 %v2535, %v2536
      %v2538 = vsub.f32 %v2468, %v2495
      %v2539 = vsub.f32 %v2471, %v2501
      %v2540 = vsub.f32 %v2474, %v2507
      %v2541 = vsub.f32 %v2477, %v2513
      %v2542 = vsub.f32 %v2480, %v2519
      %v2543 = vsub.f32 %v2483, %v2525
      %v2544 = vsub.f32 %v2486, %v2531
      %v2545 = vsub.f32 %v2489, %v2537
      %v2546 = vmul.f32 %v2538, 1.442695
      %v2547 = vpow.pop %v2546
      %v2548 = vmul.f32 %v2539, 1.442695
      %v2549 = vpow.pop %v2548
      %v2550 = vmul.f32 %v2540, 1.442695
      %v2551 = vpow.pop %v2550
      %v2552 = vmul.f32 %v2541, 1.442695
      %v2553 = vpow.pop %v2552
      %v2554 = vmul.f32 %v2542, 1.442695
      %v2555 = vpow.pop %v2554
      %v2556 = vmul.f32 %v2543, 1.442695
      %v2557 = vpow.pop %v2556
      %v2558 = vmul.f32 %v2544, 1.442695
      %v2559 = vpow.pop %v2558
      %v2560 = vmul.f32 %v2545, 1.442695
      %v2561 = vpow.pop %v2560
      %v2562 = vrot.slane %v2547, 4
      %v2563 = vadd.f32 %v2547, %v2562
      %v2564 = vrot.slane %v2563, 2
      %v2565 = vadd.f32 %v2563, %v2564
      %v2566 = vrot.slane %v2565, 1
      %v2567 = vadd.f32 %v2565, %v2566
      %v2568 = vrot.slane %v2549, 4
      %v2569 = vadd.f32 %v2549, %v2568
      %v2570 = vrot.slane %v2569, 2
      %v2571 = vadd.f32 %v2569, %v2570
      %v2572 = vrot.slane %v2571, 1
      %v2573 = vadd.f32 %v2571, %v2572
      %v2574 = vrot.slane %v2551, 4
      %v2575 = vadd.f32 %v2551, %v2574
      %v2576 = vrot.slane %v2575, 2
      %v2577 = vadd.f32 %v2575, %v2576
      %v2578 = vrot.slane %v2577, 1
      %v2579 = vadd.f32 %v2577, %v2578
      %v2580 = vrot.slane %v2553, 4
      %v2581 = vadd.f32 %v2553, %v2580
      %v2582 = vrot.slane %v2581, 2
      %v2583 = vadd.f32 %v2581, %v2582
      %v2584 = vrot.slane %v2583, 1
      %v2585 = vadd.f32 %v2583, %v2584
      %v2586 = vrot.slane %v2555, 4
      %v2587 = vadd.f32 %v2555, %v2586
      %v2588 = vrot.slane %v2587, 2
      %v2589 = vadd.f32 %v2587, %v2588
      %v2590 = vrot.slane %v2589, 1
      %v2591 = vadd.f32 %v2589, %v2590
      %v2592 = vrot.slane %v2557, 4
      %v2593 = vadd.f32 %v2557, %v2592
      %v2594 = vrot.slane %v2593, 2
      %v2595 = vadd.f32 %v2593, %v2594
      %v2596 = vrot.slane %v2595, 1
      %v2597 = vadd.f32 %v2595, %v2596
      %v2598 = vrot.slane %v2559, 4
      %v2599 = vadd.f32 %v2559, %v2598
      %v2600 = vrot.slane %v2599, 2
      %v2601 = vadd.f32 %v2599, %v2600
      %v2602 = vrot.slane %v2601, 1
      %v2603 = vadd.f32 %v2601, %v2602
      %v2604 = vrot.slane %v2561, 4
      %v2605 = vadd.f32 %v2561, %v2604
      %v2606 = vrot.slane %v2605, 2
      %v2607 = vadd.f32 %v2605, %v2606
      %v2608 = vrot.slane %v2607, 1
      %v2609 = vadd.f32 %v2607, %v2608
      %v2610 = vrcp.pop %v2567
      %v2611 = vmul.f32 %v2547, %v2610
      %v2612 = vrcp.pop %v2573
      %v2613 = vmul.f32 %v2549, %v2612
      %v2614 = vrcp.pop %v2579
      %v2615 = vmul.f32 %v2551, %v2614
      %v2616 = vrcp.pop %v2585
      %v2617 = vmul.f32 %v2553, %v2616
      %v2618 = vrcp.pop %v2591
      %v2619 = vmul.f32 %v2555, %v2618
      %v2620 = vrcp.pop %v2597
      %v2621 = vmul.f32 %v2557, %v2620
      %v2622 = vrcp.pop %v2603
      %v2623 = vmul.f32 %v2559, %v2622
      %v2624 = vrcp.pop %v2609
      %v2625 = vmul.f32 %v2561, %v2624
      %v2626 = vmul.f32 %v2304, %v2611
      %v2627 = vmul.f32 %v2305, %v2613
      %v2628 = vmul.f32 %v2306, %v2615
      %v2629 = vmul.f32 %v2307, %v2617
      %v2630 = vmul.f32 %v2308, %v2619
      %v2631 = vmul.f32 %v2309, %v2621
      %v2632 = vmul.f32 %v2310, %v2623
      %v2633 = vmul.f32 %v2311, %v2625
      %v2634 = vsel %vm641, %v2626, 0.0
      %v2635 = vrot.slane %v2634, 4
      %v2636 = vadd.f32 %v2634, %v2635
      %v2637 = vrot.slane %v2636, 2
      %v2638 = vadd.f32 %v2636, %v2637
      %v2639 = vrot.slane %v2638, 1
      %v2640 = vadd.f32 %v2638, %v2639
      %v2641 = vsel %vm641, %v2627, 0.0
      %v2642 = vrot.slane %v2641, 4
      %v2643 = vadd.f32 %v2641, %v2642
      %v2644 = vrot.slane %v2643, 2
      %v2645 = vadd.f32 %v2643, %v2644
      %v2646 = vrot.slane %v2645, 1
      %v2647 = vadd.f32 %v2645, %v2646
      %v2648 = vsel %vm641, %v2628, 0.0
      %v2649 = vrot.slane %v2648, 4
      %v2650 = vadd.f32 %v2648, %v2649
      %v2651 = vrot.slane %v2650, 2
      %v2652 = vadd.f32 %v2650, %v2651
      %v2653 = vrot.slane %v2652, 1
      %v2654 = vadd.f32 %v2652, %v2653
      %v2655 = vsel %vm641, %v2629, 0.0
      %v2656 = vrot.slane %v2655, 4
      %v2657 = vadd.f32 %v2655, %v2656
      %v2658 = vrot.slane %v2657, 2
      %v2659 = vadd.f32 %v2657, %v2658
      %v2660 = vrot.slane %v2659, 1
      %v2661 = vadd.f32 %v2659, %v2660
      %v2662 = vsel %vm641, %v2630, 0.0
      %v2663 = vrot.slane %v2662, 4
      %v2664 = vadd.f32 %v2662, %v2663
      %v2665 = vrot.slane %v2664, 2
      %v2666 = vadd.f32 %v2664, %v2665
      %v2667 = vrot.slane %v2666, 1
      %v2668 = vadd.f32 %v2666, %v2667
      %v2669 = vsel %vm641, %v2631, 0.0
      %v2670 = vrot.slane %v2669, 4
      %v2671 = vadd.f32 %v2669, %v2670
      %v2672 = vrot.slane %v2671, 2
      %v2673 = vadd.f32 %v2671, %v2672
      %v2674 = vrot.slane %v2673, 1
      %v2675 = vadd.f32 %v2673, %v2674
      %v2676 = vsel %vm641, %v2632, 0.0
      %v2677 = vrot.slane %v2676, 4
      %v2678 = vadd.f32 %v2676, %v2677
      %v2679 = vrot.slane %v2678, 2
      %v2680 = vadd.f32 %v2678, %v2679
      %v2681 = vrot.slane %v2680, 1
      %v2682 = vadd.f32 %v2680, %v2681
      %v2683 = vsel %vm641, %v2633, 0.0
      %v2684 = vrot.slane %v2683, 4
      %v2685 = vadd.f32 %v2683, %v2684
      %v2686 = vrot.slane %v2685, 2
      %v2687 = vadd.f32 %v2685, %v2686
      %v2688 = vrot.slane %v2687, 1
      %v2689 = vadd.f32 %v2687, %v2688
      %v2690 = vlaneseq
      %v2691 = vshrl.u32 %v2690, 7
      %v2692 = vsub.s32 0, %v2691
      %v2693 = vrot.slane %v189, %v2692
      %v2694 = vmul.f32 %v2640, %v2693
      %v2695 = vmul.f32 %v2647, %v2693
      %v2696 = vmul.f32 %v2654, %v2693
      %v2697 = vmul.f32 %v2661, %v2693
      %v2698 = vmul.f32 %v2668, %v2693
      %v2699 = vmul.f32 %v2675, %v2693
      %v2700 = vmul.f32 %v2682, %v2693
      %v2701 = vmul.f32 %v2689, %v2693
      %v2710 = vrot.slane %v2695, 7
      %vm2711 = vcmask 1041409
      %v2712 = vsel %vm2711, %v2710, %v2694
      %v2713 = vrot.slane %v2696, 6
      %vm2714 = vcmask 1042434
      %v2715 = vsel %vm2714, %v2713, %v2712
      %v2716 = vrot.slane %v2697, 5
      %vm2717 = vcmask 1043459
      %v2718 = vsel %vm2717, %v2716, %v2715
      %v2719 = vrot.slane %v2698, 4
      %vm2720 = vcmask 1044484
      %v2721 = vsel %vm2720, %v2719, %v2718
      %v2722 = vrot.slane %v2699, 3
      %vm2723 = vcmask 1045509
      %v2724 = vsel %vm2723, %v2722, %v2721
      %v2725 = vrot.slane %v2700, 2
      %vm2726 = vcmask 1046534
      %v2727 = vsel %vm2726, %v2725, %v2724
      %v2728 = vrot.slane %v2701, 1
      %vm2729 = vcmask 1047559
      %v2730 = vsel %vm2729, %v2728, %v2727
      %v2732 = vsel %vm641, %v2730, 0.0
      %2733 = vadd.xlane.f32.xlu0 %v2732
      %v2734 = vpop.xlane.xlu0 %2733
      %v2735 = vlaneseq
      %v2736 = vshrl.u32 %v2735, 7
      %v2737 = vsub.s32 1, %v2736
      %v2738 = vrot.slane %v189, %v2737
      %v2739 = vadd.f32 %v2734, %v2738
      %vm2740 = vcmask 7168
      %2741 = vst.msk [vmem:[%s173] sm:$0xff] %vm2740, %v2739
      %p2742 = scmp.lt.s32.totalorder %s14, 1
      %s2743 = scalar_select %p2742, %s14, 1
      %s2744 = smul.addr %s2743, 8
      %s2745 = scalar_lea.vmem %s3, %s2744
      // Predicated region
      $region33: #{forward.1} parent=31 // pred_check
        %p2746 = pneg %p100
      $region34: #{forward.1} parent=31 // pred_check_branch
        %2748 = sbr.rel (%p2746) target = $region36
      $region35: #{forward.1} parent=31 // pred_region
        _
      $region36: #{forward.1} parent=31 // pred_fallthru
        _
    $region32: #{forward.1} parent=5 // pred_fallthru
      _
    %p2749 = scmp.le.s32.totalorder 2, %s9
    // Predicated region
    $region37: #{forward.1} parent=5 // pred_check
      %p2750 = pneg %p2749
    $region38: #{forward.1} parent=5 // pred_check_branch
      %2752 = sbr.rel (%p2750) target = $region40
    $region39: #{forward.1} parent=5 // pred_region
      %s2753 = ssub.s32 %s9, 2
      // Predicated region
      $region41: #{forward.1} parent=39 // pred_check
        %p2754 = pneg %p106
      $region42: #{forward.1} parent=39 // pred_check_branch
        %2756 = sbr.rel (%p2754) target = $region44
      $region43: #{forward.1} parent=39 // pred_region
        %p2757 = scmp.lt.s32.totalorder %s15, 1
        %s2758 = scalar_select %p2757, %s15, 1
        %s2759 = smul.addr %s2758, 8
        %s2760 = scalar_lea.vmem %s3, %s2759
      $region44: #{forward.1} parent=39 // pred_fallthru
        _
    $region40: #{forward.1} parent=5 // pred_fallthru
      _
  $region6: #{forward.1} parent=0 // loop_footer
    %s13 = sadd.s32 1, %s9
  $region7: #{forward.1} parent=0 // loop_footer_branch
    %8 = sbr.rel target = $region3
  $region8: #{forward.1} parent=0 // loop_exit
    _

</llo_original>
